<compile_context>
chip_gen: v7x
topology: tpu7x:2x2x1
jax: 0.10.0
libtpu: 0.0.40
codegen_flags: <defaults>
</compile_context>

<pallas_src>
import jax
import jax.numpy as jnp
from jax.experimental import pallas as pl
from jax.experimental.pallas import tpu as pltpu


_TARGET_BLOCK_BYTES = 8 * 1024 * 1024     # ~8 MiB logical output per grid step
_VMEM_BUFFER_BUDGET = 40 * 1024 * 1024    # double-buffered in+out VMEM budget
_VMEM_LIMIT_BYTES = 48 * 1024 * 1024      # > v5e 16 MiB default, < v7x 64 MiB physical


def _round_up(a: int, b: int) -> int:
    return -(-a // b) * b


def _pos_emb_kernel_split(x_ref, f_ref, out_ref):
    # half % 128 == 0: both halves are lane-aligned -> two full-width unmasked stores.
    # x_ref: [tm, 1], f_ref: [1, half], out_ref: [tm, dim]
    half = f_ref.shape[1]
    ang = x_ref[...] * f_ref[...]                  # [tm, half]
    out_ref[:, :half] = jnp.cos(ang)
    out_ref[:, half:] = jnp.sin(ang)


def _pos_emb_kernel_fused(x_ref, f_ref, out_ref):
    # half % 128 != 0: build the full row block first (lane packing rides the XLU)
    # so there is one store per output vreg instead of two masked ones.
    ang = x_ref[...] * f_ref[...]                  # [tm, half]
    out_ref[...] = jnp.concatenate([jnp.cos(ang), jnp.sin(ang)], axis=-1)


def make_positional_embedding(dim: int, theta: float = 10000.0):
    assert dim % 2 == 0
    half = dim // 2
    # Deterministic "buffer", exactly as in the torch __init__ (half frequencies;
    # the repeat_interleave identity folds the even/odd slices back onto these).
    freqs_half = 1.0 / theta ** (jnp.arange(0, dim, 2, dtype=jnp.float32) / dim)
    freqs_row = freqs_half.reshape(1, half)

    kernel = _pos_emb_kernel_split if half % 128 == 0 else _pos_emb_kernel_fused

    # VMEM accounting per output row (lane-padded to 128) and per x row
    # ((tm, 1) lane-pads to 128 lanes), both double-buffered by the pipeline.
    out_row_vmem = _round_up(dim, 128) * 4
    x_row_vmem = 128 * 4
    per_row_vmem = 2 * (out_row_vmem + x_row_vmem)

    tm_vmem = max(8, (_VMEM_BUFFER_BUDGET // per_row_vmem) // 8 * 8)
    tm_target = max(8, (_TARGET_BLOCK_BYTES // (dim * 4)) // 8 * 8)
    tm_cap = min(tm_vmem, tm_target)

    def forward(x):
        x = jnp.asarray(x, jnp.float32)
        orig_shape = x.shape
        n = int(x.size)
        if n == 0:  # empty-input guard: no kernel call
            return jnp.zeros(orig_shape + (dim,), jnp.float32)

        # Balance block sizes (avoid near-empty edge blocks) and keep >= 2 grid
        # steps when there is enough work so v7x megacore can split the grid.
        min_blocks = 2 if n >= 16 else 1
        num_blocks = max(-(-n // tm_cap), min_blocks)
        tm = max(8, _round_up(-(-n // num_blocks), 8))
        grid = pl.cdiv(n, tm)

        xf = x.reshape(n, 1)                      # free reshape (metadata only)

        out = pl.pallas_call(
            kernel,
            out_shape=jax.ShapeDtypeStruct((n, dim), jnp.float32),
            grid_spec=pltpu.PrefetchScalarGridSpec(
                num_scalar_prefetch=0,
                grid=(grid,),
                in_specs=[
                    pl.BlockSpec((tm, 1), lambda i: (i, 0)),
                    pl.BlockSpec((1, half), lambda i: (0, 0)),
                ],
                out_specs=pl.BlockSpec((tm, dim), lambda i: (i, 0)),
            ),
            compiler_params=pltpu.CompilerParams(
                dimension_semantics=("parallel",),
                vmem_limit_bytes=_VMEM_LIMIT_BYTES,
            ),
        )(xf, freqs_row)

        return out.reshape(orig_shape + (dim,))   # free reshape

    return forward


def _reference(x, dim, theta=10000.0):
    # Literal translation of the torch forward (repeat_interleave + strided slicing).
    freqs_half = 1.0 / theta ** (jnp.arange(0, dim, 2, dtype=jnp.float32) / dim)
    freqs = jnp.repeat(freqs_half, 2)                          # [dim]
    ang = x[..., None].astype(jnp.float32) * freqs.reshape((1,) * x.ndim + (dim,))
    return jnp.concatenate([jnp.cos(ang[..., ::2]), jnp.sin(ang[..., 1::2])], axis=-1)


if __name__ == "__main__":
    key = jax.random.PRNGKey(0)

    # Main test: dim=32 (half % 128 != 0 -> fused single-store kernel).
    # x: [2, 8, 8] -> out: [2, 8, 8, 32].
    dim = 32
    x = jax.random.uniform(key, (2, 8, 8), dtype=jnp.float32) * 100.0
    out = jax.block_until_ready(make_positional_embedding(dim)(x))
    ref = _reference(x, dim)
    assert out.shape == x.shape + (dim,), out.shape
    assert jnp.allclose(out, ref, atol=1e-4, rtol=1e-5), "mismatch (fused-store path)"

    # Secondary test: dim=256 (half % 128 == 0 -> split unmasked-store kernel).
    dim2 = 256
    x2 = jax.random.uniform(jax.random.PRNGKey(1), (2, 8, 8), dtype=jnp.float32) * 100.0
    out2 = jax.block_until_ready(make_positional_embedding(dim2)(x2))
    ref2 = _reference(x2, dim2)
    assert out2.shape == x2.shape + (dim2,), out2.shape
    assert jnp.allclose(out2, ref2, atol=1e-4, rtol=1e-5), "mismatch (split-store path)"

    # Edge-block test: element count not a multiple of 8 (exercises cdiv grid masking).
    dim3 = 64
    x3 = jax.random.uniform(jax.random.PRNGKey(2), (3, 7, 5), dtype=jnp.float32) * 100.0
    out3 = jax.block_until_ready(make_positional_embedding(dim3)(x3))
    ref3 = _reference(x3, dim3)
    assert out3.shape == x3.shape + (dim3,), out3.shape
    assert jnp.allclose(out3, ref3, atol=1e-4, rtol=1e-5), "mismatch (edge-block path)"

    print("KERNEL_OK")
</pallas_src>

<mosaic_0001>
module attributes {stable_mosaic.version = 11 : i64} {
  func.func @_pos_emb_kernel_fused(%arg0: i32, %arg1: memref<64x1xf32, #tpu.memory_space<vmem>>, %arg2: memref<1x16xf32, #tpu.memory_space<vmem>>, %arg3: memref<64x32xf32, #tpu.memory_space<vmem>>) attributes {dimension_semantics = [#tpu.dimension_semantics<parallel>], iteration_bounds = array<i64: 2>, scalar_prefetch = 0 : i64, scratch_operands = 0 : i64, tpu.core_type = #tpu.core_type<tc>, window_params = [{transform_indices = @transform_0, window_bounds = array<i64: 64, 1>}, {pipeline_mode = #tpu.pipeline_mode<synchronous>, transform_indices = @transform_1, window_bounds = array<i64: 1, 16>}, {transform_indices = @transform_2, window_bounds = array<i64: 64, 32>}]} {
    %c0 = arith.constant 0 : index
    %c0_0 = arith.constant 0 : index
    %0 = vector.load %arg1[%c0, %c0_0] : memref<64x1xf32, #tpu.memory_space<vmem>>, vector<64x1xf32>
    %c0_1 = arith.constant 0 : index
    %c0_2 = arith.constant 0 : index
    %1 = vector.load %arg2[%c0_1, %c0_2] : memref<1x16xf32, #tpu.memory_space<vmem>>, vector<1x16xf32>
    %2 = vector.broadcast %0 : vector<64x1xf32> to vector<64x16xf32>
    %3 = vector.broadcast %1 : vector<1x16xf32> to vector<64x16xf32>
    %4 = arith.mulf %2, %3 : vector<64x16xf32>
    %5 = math.cos %4 : vector<64x16xf32>
    %6 = math.sin %4 : vector<64x16xf32>
    %7 = tpu.concatenate %5, %6 in 1 : vector<64x16xf32>, vector<64x16xf32> -> vector<64x32xf32>
    %c0_3 = arith.constant 0 : index
    %c0_4 = arith.constant 0 : index
    %8 = vector.load %arg3[%c0_3, %c0_4] : memref<64x32xf32, #tpu.memory_space<vmem>>, vector<64x32xf32>
    tpu.vector_store %arg3[%c0_3, %c0_4], %7 {strides = array<i32>} : memref<64x32xf32, #tpu.memory_space<vmem>>, vector<64x32xf32>,
    return
  }
  func.func @transform_0(%arg0: i32) -> (i32, i32) {
    %c0_i32 = arith.constant 0 : i32
    %c0_i32_0 = arith.constant 0 : i32
    return %arg0, %c0_i32 : i32, i32
  }
  func.func @transform_1(%arg0: i32) -> (i32, i32) {
    %c0_i32 = arith.constant 0 : i32
    %c0_i32_0 = arith.constant 0 : i32
    %c0_i32_1 = arith.constant 0 : i32
    return %c0_i32, %c0_i32_0 : i32, i32
  }
  func.func @transform_2(%arg0: i32) -> (i32, i32) {
    %c0_i32 = arith.constant 0 : i32
    %c0_i32_0 = arith.constant 0 : i32
    return %arg0, %c0_i32 : i32, i32
  }
}

</mosaic_0001>

<llo_original>
// kernel: tpu_custom_call.1
$region0: #{tpu_custom_call.1}
  #allocation0 [shape = 'u32[]', space=smem, size = 0x4, offset = 0x4, fixed_abs, tag = 'smem constant byte address 0x4 - core index']
  #allocation1 [shape = 'u32[144,128]{1,0:T(1,128)}', space=vmem, size = 0x12000, scoped, tag = 'internal scratch']
  %s0 = inlined_call_operand.vmem [shape: f32[128,1], index: 0, kind: input, shape index: {}]
  %s1 = inlined_call_operand.vmem [shape: f32[1,16], index: 1, kind: input, shape index: {}]
  %s2 = inlined_call_operand.vmem [shape: f32[128,32], index: 2, kind: output, shape index: {}]
  %s3 = sld [smem:[#allocation0]]
  $region41: #{tpu_custom_call.1} parent=0
    _
  %s5 = ssub.s32 1, %s3
  %s6 = scalar_select 0, %s5, %s3
  loop: start=0, step=1, limit=4
  $region2: #{tpu_custom_call.1} parent=0 // loop_pre_header
    _
  $region3: #{tpu_custom_call.1} parent=0 // loop_header
    %s8 = sphi 0, %s12
    %p9 = scmp.ge.s32.totalorder %s8, 4
    %s18 = sphi 0, %s20
    %s21 = sphi 0, %s18
    %s22 = sphi 0, %s21
    %s38 = sphi 0, %s22
    %s42 = sphi 0, %s42
    %s44 = sphi 0, %s42
    %s45 = sphi 0, %s44
    %s59 = sphi 0, %s45
    %s65 = sphi 0, %s67
    %s68 = sphi 0, %s65
    %s69 = sphi 0, %s68
    %s85 = sphi 0, %s69
  $region4: #{tpu_custom_call.1} parent=0 // loop_header_branch
    %11 = sbr.rel (%p9) target = $region8
  $region5: #{tpu_custom_call.1} parent=0 // loop_body
    %s13 = ssub.s32 %s8, 1
    %s14 = ssub.s32 %s8, 2
    %s15 = sadd.s32 %s8, 1
    %s16 = ssub.s32 %s8, %s15
    %p17 = scmp.eq.s32.totalorder %s16, 0
    %s19 = sadd.s32 %s18, 1
    %s20 = scalar_select %p17, %s18, %s19
    %p23 = pneg %p17
    %p24 = scmp.eq.s32.totalorder %s8, 1
    %p25 = por %p23, %p24
    %p26 = scmp.ne.s32.totalorder %s18, %s21
    %p27 = scmp.eq.s32.totalorder %s8, 0
    %p28 = por %p26, %p27
    %p29 = scmp.ne.s32.totalorder %s18, %s21
    %p30 = scmp.eq.s32.totalorder %s13, 1
    %p31 = por %p29, %p30
    %p32 = scmp.ne.s32.totalorder %s21, %s22
    %p33 = scmp.eq.s32.totalorder %s13, 0
    %p34 = por %p32, %p33
    %p35 = scmp.ne.s32.totalorder %s21, %s22
    %p36 = scmp.eq.s32.totalorder %s14, 1
    %p37 = por %p35, %p36
    %p39 = scmp.ne.s32.totalorder %s22, %s38
    %p40 = scmp.eq.s32.totalorder %s14, 0
    %p41 = por %p39, %p40
    %s43 = sadd.s32 %s42, 1
    %p46 = scmp.eq.s32.totalorder %s8, 1
    %p47 = scmp.ne.s32.totalorder %s42, %s44
    %p48 = scmp.eq.s32.totalorder %s8, 0
    %p49 = por %p47, %p48
    %p50 = scmp.ne.s32.totalorder %s42, %s44
    %p51 = scmp.eq.s32.totalorder %s13, 1
    %p52 = por %p50, %p51
    %p53 = scmp.ne.s32.totalorder %s44, %s45
    %p54 = scmp.eq.s32.totalorder %s13, 0
    %p55 = por %p53, %p54
    %p56 = scmp.ne.s32.totalorder %s44, %s45
    %p57 = scmp.eq.s32.totalorder %s14, 1
    %p58 = por %p56, %p57
    %p60 = scmp.ne.s32.totalorder %s45, %s59
    %p61 = scmp.eq.s32.totalorder %s14, 0
    %p62 = por %p60, %p61
    %s63 = ssub.s32 %s8, %s15
    %p64 = scmp.eq.s32.totalorder %s63, 0
    %s66 = sadd.s32 %s65, 1
    %s67 = scalar_select %p64, %s65, %s66
    %p70 = pneg %p64
    %p71 = scmp.eq.s32.totalorder %s8, 1
    %p72 = por %p70, %p71
    %p73 = scmp.ne.s32.totalorder %s65, %s68
    %p74 = scmp.eq.s32.totalorder %s8, 0
    %p75 = por %p73, %p74
    %p76 = scmp.ne.s32.totalorder %s65, %s68
    %p77 = scmp.eq.s32.totalorder %s13, 1
    %p78 = por %p76, %p77
    %p79 = scmp.ne.s32.totalorder %s68, %s69
    %p80 = scmp.eq.s32.totalorder %s13, 0
    %p81 = por %p79, %p80
    %p82 = scmp.ne.s32.totalorder %s68, %s69
    %p83 = scmp.eq.s32.totalorder %s14, 1
    %p84 = por %p82, %p83
    %p86 = scmp.ne.s32.totalorder %s69, %s85
    %p87 = scmp.eq.s32.totalorder %s14, 0
    %p88 = por %p86, %p87
    %p89 = scmp.le.s32.totalorder 1, %s8
    %p90 = scmp.lt.s32.totalorder %s8, 3
    %p91 = pnand %p89, %p90
    %p92 = pneg %p91
    // Predicated region
    $region9: #{tpu_custom_call.1} parent=5 // pred_check
      _
    $region10: #{tpu_custom_call.1} parent=5 // pred_check_branch
      %94 = sbr.rel (%p91) target = $region12
    $region11: #{tpu_custom_call.1} parent=5 // pred_region
      %s95 = ssub.s32 %s8, 1
      // Predicated region
      $region13: #{tpu_custom_call.1} parent=11 // pred_check
        %p96 = pneg %p55
      $region14: #{tpu_custom_call.1} parent=11 // pred_check_branch
        %98 = sbr.rel (%p96) target = $region16
      $region15: #{tpu_custom_call.1} parent=11 // pred_region
        _
      $region16: #{tpu_custom_call.1} parent=11 // pred_fallthru
        _
    $region12: #{tpu_custom_call.1} parent=5 // pred_fallthru
      _
    %p99 = scmp.lt.s32.totalorder %s8, 2
    // Predicated region
    $region17: #{tpu_custom_call.1} parent=5 // pred_check
      %p100 = pneg %p99
    $region18: #{tpu_custom_call.1} parent=5 // pred_check_branch
      %102 = sbr.rel (%p100) target = $region20
    $region19: #{tpu_custom_call.1} parent=5 // pred_region
      // Predicated region
      $region21: #{tpu_custom_call.1} parent=19 // pred_check
        %p103 = pneg %p28
      $region22: #{tpu_custom_call.1} parent=19 // pred_check_branch
        %105 = sbr.rel (%p103) target = $region24
      $region23: #{tpu_custom_call.1} parent=19 // pred_region
        %s106 = smul.u32 8, %s8
        %p107 = scmp.lt.s32.totalorder %s106, 15
        %s108 = scalar_select %p107, %s106, 15
        %s109 = smul.addr %s108, 8
        %s110 = scalar_lea.vmem %s0, %s109
        %s111 = smul.u32 8, %s8
      $region24: #{tpu_custom_call.1} parent=19 // pred_fallthru
        _
    $region20: #{tpu_custom_call.1} parent=5 // pred_fallthru
      _
    %p112 = scmp.le.s32.totalorder 1, %s8
    %p113 = scmp.lt.s32.totalorder %s8, 3
    %p114 = pnand %p112, %p113
    %p115 = pneg %p114
    // Predicated region
    $region25: #{tpu_custom_call.1} parent=5 // pred_check
      _
    $region26: #{tpu_custom_call.1} parent=5 // pred_check_branch
      %117 = sbr.rel (%p114) target = $region28
    $region27: #{tpu_custom_call.1} parent=5 // pred_region
      %s118 = ssub.s32 %s8, 1
      %s119 = smul.u32 8, %s13
      %p120 = scmp.lt.s32.totalorder %s119, 15
      %s121 = scalar_select %p120, %s119, 15
      %s122 = smul.addr %s121, 8
      %s123 = scalar_lea.vmem %s0, %s122
      %p124 = pneg %p34
      %p125 = pneg %p31
      %p126 = pneg %p55
      %p127 = pneg %p52
      %p128 = pneg %p81
      %p129 = pneg %p78
      %s130 = smul.u32 8, %s13
      %p131 = scmp.lt.s32.totalorder %s130, 15
      %s132 = scalar_select %p131, %s130, 15
      %s133 = smul.addr %s132, 8
      %s134 = scalar_lea.vmem %s2, %s133
      %s135 = smul.u32 8, %s13
      %p136 = scmp.lt.s32.totalorder %s135, 15
      %s137 = scalar_select %p136, %s135, 15
      %s138 = smul.addr %s137, 8
      %s139 = scalar_lea.vmem %s0, %s138
      %s140 = smul.u32 8, %s13
      %s141 = smul.u32 8, %s13
      %p142 = scmp.lt.s32.totalorder %s141, 15
      %s143 = scalar_select %p142, %s141, 15
      %s144 = smul.addr %s143, 8
      %s145 = scalar_lea.vmem %s2, %s144
      %s146 = smul.u32 8, %s13
      %v147 = vld [vmem:[%s139] sm:$0xff]
      %v148 = vld [vmem:[%s139 + $0x8] sm:$0xff]
      %v149 = vld [vmem:[%s139 + $0x10] sm:$0xff]
      %v150 = vld [vmem:[%s139 + $0x18] sm:$0xff]
      %v151 = vld [vmem:[%s139 + $0x20] sm:$0xff]
      %v152 = vld [vmem:[%s139 + $0x28] sm:$0xff]
      %v153 = vld [vmem:[%s139 + $0x30] sm:$0xff]
      %v154 = vld [vmem:[%s139 + $0x38] sm:$0xff]
      %v155 = vld [vmem:[%s1] sm:$0x1]
      %157 = vset.pattern.permute.xlu0 0
      %158 = vperm.xlu0 %157, %v147
      %v159 = vpop.permute.xlu0 %158
      %162 = vset.pattern.permute.xlu0 0
      %163 = vperm.xlu0 %162, %v148
      %v164 = vpop.permute.xlu0 %163
      %167 = vset.pattern.permute.xlu0 0
      %168 = vperm.xlu0 %167, %v149
      %v169 = vpop.permute.xlu0 %168
      %172 = vset.pattern.permute.xlu0 0
      %173 = vperm.xlu0 %172, %v150
      %v174 = vpop.permute.xlu0 %173
      %177 = vset.pattern.permute.xlu0 0
      %178 = vperm.xlu0 %177, %v151
      %v179 = vpop.permute.xlu0 %178
      %182 = vset.pattern.permute.xlu0 0
      %183 = vperm.xlu0 %182, %v152
      %v184 = vpop.permute.xlu0 %183
      %187 = vset.pattern.permute.xlu0 0
      %188 = vperm.xlu0 %187, %v153
      %v189 = vpop.permute.xlu0 %188
      %192 = vset.pattern.permute.xlu0 0
      %193 = vperm.xlu0 %192, %v154
      %v194 = vpop.permute.xlu0 %193
      %v197 = vlaneseq
      %v198 = vshrl.u32 %v197, 7
      %v199 = vsub.s32 0, %v198
      %v200 = vrot.slane %v155, %v199
      %v202 = vmul.f32 %v159, %v200
      %v203 = vmul.f32 %v164, %v200
      %v204 = vmul.f32 %v169, %v200
      %v205 = vmul.f32 %v174, %v200
      %v206 = vmul.f32 %v179, %v200
      %v207 = vmul.f32 %v184, %v200
      %v208 = vmul.f32 %v189, %v200
      %v209 = vmul.f32 %v194, %v200
      %v210 = vand.u32 2147483647, %v202
      %vm211 = vcmp.le.f32.partialorder %v210, 0.7853982
      %vm212 = vcmp.lt.s32.totalorder %v202, 0
      %v213 = vand.u32 %v202, 2139095040
      %v214 = vshrl.u32 %v213, 23
      %v215 = vsub.s32 %v214, 127
      %v216 = vand.u32 2147483647, %v202
      %v217 = vand.u32 %v216, 8388607
      %v218 = vor.u32 %v217, 8388608
      %v219 = vsub.s32 0, %v218
      %v220 = vadd.s32 %v215, 1
      %vm221 = vcmp.gt.s32.totalorder %v220, 0
      %v222 = vsel %vm221, %v220, 0
      %v223 = vshrl.u32 %v222, 5
      %v224 = vand.u32 %v222, 31
      %v225 = vsub.s32 32, %v224
      %v226 = vshrl.u32 683565275, %v225
      %v227 = vshll.u32 683565275, %v224
      %v228 = vshrl.u32 2475754826, %v225
      %v229 = vor.u32 %v227, %v228
      %v230 = vshll.u32 2475754826, %v224
      %v231 = vshrl.u32 2131351028, %v225
      %v232 = vor.u32 %v230, %v231
      %v233 = vshll.u32 2131351028, %v224
      %v234 = vshrl.u32 2102212464, %v225
      %v235 = vor.u32 %v233, %v234
      %v236 = vshll.u32 2102212464, %v224
      %v237 = vshrl.u32 920167782, %v225
      %v238 = vor.u32 %v236, %v237
      %v239 = vshll.u32 920167782, %v224
      %v240 = vshrl.u32 1326507024, %v225
      %v241 = vor.u32 %v239, %v240
      %vm242 = vcmp.lt.s32.totalorder %v223, 1
      %vm243 = vcmp.lt.s32.totalorder %v223, 2
      %vm244 = vcmp.lt.s32.totalorder %v223, 3
      %vm245 = vcmp.lt.s32.totalorder %v223, 4
      %v246 = vsel %vm242, %v226, %v229
      %v247 = vsel %vm245, %v235, 2102212464
      %v248 = vsel %vm244, %v232, %v247
      %v249 = vsel %vm243, %v246, %v248
      %v250 = vsel %vm242, %v229, %v232
      %v251 = vsel %vm245, %v238, 920167782
      %v252 = vsel %vm244, %v235, %v251
      %v253 = vsel %vm243, %v250, %v252
      %v254 = vsel %vm242, %v232, %v235
      %v255 = vsel %vm245, %v241, 1326507024
      %v256 = vsel %vm244, %v238, %v255
      %v257 = vsel %vm243, %v254, %v256
      %v258 = vshll.u32 %v218, 8
      %v259 = vmul.u32.u64.compose %v258, %v257
      %v260 = vextract.low.u32 %v259
      %v261 = vextract.high.u32 %v259
      %v262 = vmul.u32.u64.compose %v258, %v253
      %v263 = vextract.low.u32 %v262
      %v264 = vextract.high.u32 %v262
      %v265 = vmul.u32 %v258, %v249
      %v266 = vadd.s32 %v261, %v263
      %vm267 = vc.u32 %v261, %v263
      %v268 = vadd.s32 %v264, 1
      %v269 = vsel %vm267, %v268, %v264
      %v270 = vadd.s32 %v265, %v269
      %v271 = vadd.s32 %v270, 536870912
      %v272 = vshrl.u32 %v271, 30
      %v273 = vshll.u32 %v272, 30
      %v274 = vsub.s32 %v270, %v273
      %vm275 = vcmp.lt.s32.totalorder %v274, 0
      %v276 = vsub.s32 0, %v274
      %v277 = vsel %vm275, %v276, %v274
      %v278 = vclz %v277
      %v279 = vsub.s32 %v278, 2
      %vm280 = vcmp.gt.s32.totalorder 0, %v279
      %v281 = vsel %vm280, 0, %v279
      %v282 = vsub.s32 32, %v281
      %v283 = vshll.u32 %v274, %v281
      %v284 = vshrl.u32 %v266, %v282
      %v285 = vor.u32 %v283, %v284
      %v286 = vsub.s32 4294967266, %v281
      %v287 = vadd.s32 %v286, 127
      %v288 = vshll.u32 %v287, 23
      %v289 = vor.u32 4788187, %v288
      %v290 = vand.u32 2147483647, %v289
      %v292 = vcvt.s32.f32 %v285
      %v293 = vmul.f32 %v292, %v290
      %v294 = vxor.u32 %v293, 2147483648
      %v295 = vsel %vm212, %v294, %v293
      %v296 = vsub.s32 4, %v272
      %v297 = vsel %vm212, %v296, %v272
      %v298 = vsel %vm211, %v202, %v295
      %v299 = vsel %vm211, 0, %v297
      %v300 = vcosq.f32.pop %v298
      %v301 = vsinq.f32.pop %v298
      %vm302 = vweird.f32 %v202
      %v303 = vand.u32 %v299, 3
      %vm304 = vcmp.lt.s32.totalorder %v303, 2
      %vm305 = vcmp.eq.s32.totalorder %v303, 0
      %v306 = vxor.u32 %v301, 2147483648
      %v307 = vsel %vm305, %v300, %v306
      %vm308 = vcmp.eq.s32.totalorder %v303, 2
      %v309 = vxor.u32 %v300, 2147483648
      %v310 = vsel %vm308, %v309, %v301
      %v311 = vsel %vm304, %v307, %v310
      %v312 = vsel %vm302, nan, %v311
      %v313 = vand.u32 2147483647, %v203
      %vm314 = vcmp.le.f32.partialorder %v313, 0.7853982
      %vm315 = vcmp.lt.s32.totalorder %v203, 0
      %v316 = vand.u32 %v203, 2139095040
      %v317 = vshrl.u32 %v316, 23
      %v318 = vsub.s32 %v317, 127
      %v319 = vand.u32 2147483647, %v203
      %v320 = vand.u32 %v319, 8388607
      %v321 = vor.u32 %v320, 8388608
      %v322 = vsub.s32 0, %v321
      %v323 = vadd.s32 %v318, 1
      %vm324 = vcmp.gt.s32.totalorder %v323, 0
      %v325 = vsel %vm324, %v323, 0
      %v326 = vshrl.u32 %v325, 5
      %v327 = vand.u32 %v325, 31
      %v328 = vsub.s32 32, %v327
      %v329 = vshrl.u32 683565275, %v328
      %v330 = vshll.u32 683565275, %v327
      %v331 = vshrl.u32 2475754826, %v328
      %v332 = vor.u32 %v330, %v331
      %v333 = vshll.u32 2475754826, %v327
      %v334 = vshrl.u32 2131351028, %v328
      %v335 = vor.u32 %v333, %v334
      %v336 = vshll.u32 2131351028, %v327
      %v337 = vshrl.u32 2102212464, %v328
      %v338 = vor.u32 %v336, %v337
      %v339 = vshll.u32 2102212464, %v327
      %v340 = vshrl.u32 920167782, %v328
      %v341 = vor.u32 %v339, %v340
      %v342 = vshll.u32 920167782, %v327
      %v343 = vshrl.u32 1326507024, %v328
      %v344 = vor.u32 %v342, %v343
      %vm345 = vcmp.lt.s32.totalorder %v326, 1
      %vm346 = vcmp.lt.s32.totalorder %v326, 2
      %vm347 = vcmp.lt.s32.totalorder %v326, 3
      %vm348 = vcmp.lt.s32.totalorder %v326, 4
      %v349 = vsel %vm345, %v329, %v332
      %v350 = vsel %vm348, %v338, 2102212464
      %v351 = vsel %vm347, %v335, %v350
      %v352 = vsel %vm346, %v349, %v351
      %v353 = vsel %vm345, %v332, %v335
      %v354 = vsel %vm348, %v341, 920167782
      %v355 = vsel %vm347, %v338, %v354
      %v356 = vsel %vm346, %v353, %v355
      %v357 = vsel %vm345, %v335, %v338
      %v358 = vsel %vm348, %v344, 1326507024
      %v359 = vsel %vm347, %v341, %v358
      %v360 = vsel %vm346, %v357, %v359
      %v361 = vshll.u32 %v321, 8
      %v362 = vmul.u32.u64.compose %v361, %v360
      %v363 = vextract.low.u32 %v362
      %v364 = vextract.high.u32 %v362
      %v365 = vmul.u32.u64.compose %v361, %v356
      %v366 = vextract.low.u32 %v365
      %v367 = vextract.high.u32 %v365
      %v368 = vmul.u32 %v361, %v352
      %v369 = vadd.s32 %v364, %v366
      %vm370 = vc.u32 %v364, %v366
      %v371 = vadd.s32 %v367, 1
      %v372 = vsel %vm370, %v371, %v367
      %v373 = vadd.s32 %v368, %v372
      %v374 = vadd.s32 %v373, 536870912
      %v375 = vshrl.u32 %v374, 30
      %v376 = vshll.u32 %v375, 30
      %v377 = vsub.s32 %v373, %v376
      %vm378 = vcmp.lt.s32.totalorder %v377, 0
      %v379 = vsub.s32 0, %v377
      %v380 = vsel %vm378, %v379, %v377
      %v381 = vclz %v380
      %v382 = vsub.s32 %v381, 2
      %vm383 = vcmp.gt.s32.totalorder 0, %v382
      %v384 = vsel %vm383, 0, %v382
      %v385 = vsub.s32 32, %v384
      %v386 = vshll.u32 %v377, %v384
      %v387 = vshrl.u32 %v369, %v385
      %v388 = vor.u32 %v386, %v387
      %v389 = vsub.s32 4294967266, %v384
      %v390 = vadd.s32 %v389, 127
      %v391 = vshll.u32 %v390, 23
      %v392 = vor.u32 4788187, %v391
      %v393 = vand.u32 2147483647, %v392
      %v395 = vcvt.s32.f32 %v388
      %v396 = vmul.f32 %v395, %v393
      %v397 = vxor.u32 %v396, 2147483648
      %v398 = vsel %vm315, %v397, %v396
      %v399 = vsub.s32 4, %v375
      %v400 = vsel %vm315, %v399, %v375
      %v401 = vsel %vm314, %v203, %v398
      %v402 = vsel %vm314, 0, %v400
      %v403 = vcosq.f32.pop %v401
      %v404 = vsinq.f32.pop %v401
      %vm405 = vweird.f32 %v203
      %v406 = vand.u32 %v402, 3
      %vm407 = vcmp.lt.s32.totalorder %v406, 2
      %vm408 = vcmp.eq.s32.totalorder %v406, 0
      %v409 = vxor.u32 %v404, 2147483648
      %v410 = vsel %vm408, %v403, %v409
      %vm411 = vcmp.eq.s32.totalorder %v406, 2
      %v412 = vxor.u32 %v403, 2147483648
      %v413 = vsel %vm411, %v412, %v404
      %v414 = vsel %vm407, %v410, %v413
      %v415 = vsel %vm405, nan, %v414
      %v416 = vand.u32 2147483647, %v204
      %vm417 = vcmp.le.f32.partialorder %v416, 0.7853982
      %vm418 = vcmp.lt.s32.totalorder %v204, 0
      %v419 = vand.u32 %v204, 2139095040
      %v420 = vshrl.u32 %v419, 23
      %v421 = vsub.s32 %v420, 127
      %v422 = vand.u32 2147483647, %v204
      %v423 = vand.u32 %v422, 8388607
      %v424 = vor.u32 %v423, 8388608
      %v425 = vsub.s32 0, %v424
      %v426 = vadd.s32 %v421, 1
      %vm427 = vcmp.gt.s32.totalorder %v426, 0
      %v428 = vsel %vm427, %v426, 0
      %v429 = vshrl.u32 %v428, 5
      %v430 = vand.u32 %v428, 31
      %v431 = vsub.s32 32, %v430
      %v432 = vshrl.u32 683565275, %v431
      %v433 = vshll.u32 683565275, %v430
      %v434 = vshrl.u32 2475754826, %v431
      %v435 = vor.u32 %v433, %v434
      %v436 = vshll.u32 2475754826, %v430
      %v437 = vshrl.u32 2131351028, %v431
      %v438 = vor.u32 %v436, %v437
      %v439 = vshll.u32 2131351028, %v430
      %v440 = vshrl.u32 2102212464, %v431
      %v441 = vor.u32 %v439, %v440
      %v442 = vshll.u32 2102212464, %v430
      %v443 = vshrl.u32 920167782, %v431
      %v444 = vor.u32 %v442, %v443
      %v445 = vshll.u32 920167782, %v430
      %v446 = vshrl.u32 1326507024, %v431
      %v447 = vor.u32 %v445, %v446
      %vm448 = vcmp.lt.s32.totalorder %v429, 1
      %vm449 = vcmp.lt.s32.totalorder %v429, 2
      %vm450 = vcmp.lt.s32.totalorder %v429, 3
      %vm451 = vcmp.lt.s32.totalorder %v429, 4
      %v452 = vsel %vm448, %v432, %v435
      %v453 = vsel %vm451, %v441, 2102212464
      %v454 = vsel %vm450, %v438, %v453
      %v455 = vsel %vm449, %v452, %v454
      %v456 = vsel %vm448, %v435, %v438
      %v457 = vsel %vm451, %v444, 920167782
      %v458 = vsel %vm450, %v441, %v457
      %v459 = vsel %vm449, %v456, %v458
      %v460 = vsel %vm448, %v438, %v441
      %v461 = vsel %vm451, %v447, 1326507024
      %v462 = vsel %vm450, %v444, %v461
      %v463 = vsel %vm449, %v460, %v462
      %v464 = vshll.u32 %v424, 8
      %v465 = vmul.u32.u64.compose %v464, %v463
      %v466 = vextract.low.u32 %v465
      %v467 = vextract.high.u32 %v465
      %v468 = vmul.u32.u64.compose %v464, %v459
      %v469 = vextract.low.u32 %v468
      %v470 = vextract.high.u32 %v468
      %v471 = vmul.u32 %v464, %v455
      %v472 = vadd.s32 %v467, %v469
      %vm473 = vc.u32 %v467, %v469
      %v474 = vadd.s32 %v470, 1
      %v475 = vsel %vm473, %v474, %v470
      %v476 = vadd.s32 %v471, %v475
      %v477 = vadd.s32 %v476, 536870912
      %v478 = vshrl.u32 %v477, 30
      %v479 = vshll.u32 %v478, 30
      %v480 = vsub.s32 %v476, %v479
      %vm481 = vcmp.lt.s32.totalorder %v480, 0
      %v482 = vsub.s32 0, %v480
      %v483 = vsel %vm481, %v482, %v480
      %v484 = vclz %v483
      %v485 = vsub.s32 %v484, 2
      %vm486 = vcmp.gt.s32.totalorder 0, %v485
      %v487 = vsel %vm486, 0, %v485
      %v488 = vsub.s32 32, %v487
      %v489 = vshll.u32 %v480, %v487
      %v490 = vshrl.u32 %v472, %v488
      %v491 = vor.u32 %v489, %v490
      %v492 = vsub.s32 4294967266, %v487
      %v493 = vadd.s32 %v492, 127
      %v494 = vshll.u32 %v493, 23
      %v495 = vor.u32 4788187, %v494
      %v496 = vand.u32 2147483647, %v495
      %v498 = vcvt.s32.f32 %v491
      %v499 = vmul.f32 %v498, %v496
      %v500 = vxor.u32 %v499, 2147483648
      %v501 = vsel %vm418, %v500, %v499
      %v502 = vsub.s32 4, %v478
      %v503 = vsel %vm418, %v502, %v478
      %v504 = vsel %vm417, %v204, %v501
      %v505 = vsel %vm417, 0, %v503
      %v506 = vcosq.f32.pop %v504
      %v507 = vsinq.f32.pop %v504
      %vm508 = vweird.f32 %v204
      %v509 = vand.u32 %v505, 3
      %vm510 = vcmp.lt.s32.totalorder %v509, 2
      %vm511 = vcmp.eq.s32.totalorder %v509, 0
      %v512 = vxor.u32 %v507, 2147483648
      %v513 = vsel %vm511, %v506, %v512
      %vm514 = vcmp.eq.s32.totalorder %v509, 2
      %v515 = vxor.u32 %v506, 2147483648
      %v516 = vsel %vm514, %v515, %v507
      %v517 = vsel %vm510, %v513, %v516
      %v518 = vsel %vm508, nan, %v517
      %v519 = vand.u32 2147483647, %v205
      %vm520 = vcmp.le.f32.partialorder %v519, 0.7853982
      %vm521 = vcmp.lt.s32.totalorder %v205, 0
      %v522 = vand.u32 %v205, 2139095040
      %v523 = vshrl.u32 %v522, 23
      %v524 = vsub.s32 %v523, 127
      %v525 = vand.u32 2147483647, %v205
      %v526 = vand.u32 %v525, 8388607
      %v527 = vor.u32 %v526, 8388608
      %v528 = vsub.s32 0, %v527
      %v529 = vadd.s32 %v524, 1
      %vm530 = vcmp.gt.s32.totalorder %v529, 0
      %v531 = vsel %vm530, %v529, 0
      %v532 = vshrl.u32 %v531, 5
      %v533 = vand.u32 %v531, 31
      %v534 = vsub.s32 32, %v533
      %v535 = vshrl.u32 683565275, %v534
      %v536 = vshll.u32 683565275, %v533
      %v537 = vshrl.u32 2475754826, %v534
      %v538 = vor.u32 %v536, %v537
      %v539 = vshll.u32 2475754826, %v533
      %v540 = vshrl.u32 2131351028, %v534
      %v541 = vor.u32 %v539, %v540
      %v542 = vshll.u32 2131351028, %v533
      %v543 = vshrl.u32 2102212464, %v534
      %v544 = vor.u32 %v542, %v543
      %v545 = vshll.u32 2102212464, %v533
      %v546 = vshrl.u32 920167782, %v534
      %v547 = vor.u32 %v545, %v546
      %v548 = vshll.u32 920167782, %v533
      %v549 = vshrl.u32 1326507024, %v534
      %v550 = vor.u32 %v548, %v549
      %vm551 = vcmp.lt.s32.totalorder %v532, 1
      %vm552 = vcmp.lt.s32.totalorder %v532, 2
      %vm553 = vcmp.lt.s32.totalorder %v532, 3
      %vm554 = vcmp.lt.s32.totalorder %v532, 4
      %v555 = vsel %vm551, %v535, %v538
      %v556 = vsel %vm554, %v544, 2102212464
      %v557 = vsel %vm553, %v541, %v556
      %v558 = vsel %vm552, %v555, %v557
      %v559 = vsel %vm551, %v538, %v541
      %v560 = vsel %vm554, %v547, 920167782
      %v561 = vsel %vm553, %v544, %v560
      %v562 = vsel %vm552, %v559, %v561
      %v563 = vsel %vm551, %v541, %v544
      %v564 = vsel %vm554, %v550, 1326507024
      %v565 = vsel %vm553, %v547, %v564
      %v566 = vsel %vm552, %v563, %v565
      %v567 = vshll.u32 %v527, 8
      %v568 = vmul.u32.u64.compose %v567, %v566
      %v569 = vextract.low.u32 %v568
      %v570 = vextract.high.u32 %v568
      %v571 = vmul.u32.u64.compose %v567, %v562
      %v572 = vextract.low.u32 %v571
      %v573 = vextract.high.u32 %v571
      %v574 = vmul.u32 %v567, %v558
      %v575 = vadd.s32 %v570, %v572
      %vm576 = vc.u32 %v570, %v572
      %v577 = vadd.s32 %v573, 1
      %v578 = vsel %vm576, %v577, %v573
      %v579 = vadd.s32 %v574, %v578
      %v580 = vadd.s32 %v579, 536870912
      %v581 = vshrl.u32 %v580, 30
      %v582 = vshll.u32 %v581, 30
      %v583 = vsub.s32 %v579, %v582
      %vm584 = vcmp.lt.s32.totalorder %v583, 0
      %v585 = vsub.s32 0, %v583
      %v586 = vsel %vm584, %v585, %v583
      %v587 = vclz %v586
      %v588 = vsub.s32 %v587, 2
      %vm589 = vcmp.gt.s32.totalorder 0, %v588
      %v590 = vsel %vm589, 0, %v588
      %v591 = vsub.s32 32, %v590
      %v592 = vshll.u32 %v583, %v590
      %v593 = vshrl.u32 %v575, %v591
      %v594 = vor.u32 %v592, %v593
      %v595 = vsub.s32 4294967266, %v590
      %v596 = vadd.s32 %v595, 127
      %v597 = vshll.u32 %v596, 23
      %v598 = vor.u32 4788187, %v597
      %v599 = vand.u32 2147483647, %v598
      %v601 = vcvt.s32.f32 %v594
      %v602 = vmul.f32 %v601, %v599
      %v603 = vxor.u32 %v602, 2147483648
      %v604 = vsel %vm521, %v603, %v602
      %v605 = vsub.s32 4, %v581
      %v606 = vsel %vm521, %v605, %v581
      %v607 = vsel %vm520, %v205, %v604
      %v608 = vsel %vm520, 0, %v606
      %v609 = vcosq.f32.pop %v607
      %v610 = vsinq.f32.pop %v607
      %vm611 = vweird.f32 %v205
      %v612 = vand.u32 %v608, 3
      %vm613 = vcmp.lt.s32.totalorder %v612, 2
      %vm614 = vcmp.eq.s32.totalorder %v612, 0
      %v615 = vxor.u32 %v610, 2147483648
      %v616 = vsel %vm614, %v609, %v615
      %vm617 = vcmp.eq.s32.totalorder %v612, 2
      %v618 = vxor.u32 %v609, 2147483648
      %v619 = vsel %vm617, %v618, %v610
      %v620 = vsel %vm613, %v616, %v619
      %v621 = vsel %vm611, nan, %v620
      %v622 = vand.u32 2147483647, %v206
      %vm623 = vcmp.le.f32.partialorder %v622, 0.7853982
      %vm624 = vcmp.lt.s32.totalorder %v206, 0
      %v625 = vand.u32 %v206, 2139095040
      %v626 = vshrl.u32 %v625, 23
      %v627 = vsub.s32 %v626, 127
      %v628 = vand.u32 2147483647, %v206
      %v629 = vand.u32 %v628, 8388607
      %v630 = vor.u32 %v629, 8388608
      %v631 = vsub.s32 0, %v630
      %v632 = vadd.s32 %v627, 1
      %vm633 = vcmp.gt.s32.totalorder %v632, 0
      %v634 = vsel %vm633, %v632, 0
      %v635 = vshrl.u32 %v634, 5
      %v636 = vand.u32 %v634, 31
      %v637 = vsub.s32 32, %v636
      %v638 = vshrl.u32 683565275, %v637
      %v639 = vshll.u32 683565275, %v636
      %v640 = vshrl.u32 2475754826, %v637
      %v641 = vor.u32 %v639, %v640
      %v642 = vshll.u32 2475754826, %v636
      %v643 = vshrl.u32 2131351028, %v637
      %v644 = vor.u32 %v642, %v643
      %v645 = vshll.u32 2131351028, %v636
      %v646 = vshrl.u32 2102212464, %v637
      %v647 = vor.u32 %v645, %v646
      %v648 = vshll.u32 2102212464, %v636
      %v649 = vshrl.u32 920167782, %v637
      %v650 = vor.u32 %v648, %v649
      %v651 = vshll.u32 920167782, %v636
      %v652 = vshrl.u32 1326507024, %v637
      %v653 = vor.u32 %v651, %v652
      %vm654 = vcmp.lt.s32.totalorder %v635, 1
      %vm655 = vcmp.lt.s32.totalorder %v635, 2
      %vm656 = vcmp.lt.s32.totalorder %v635, 3
      %vm657 = vcmp.lt.s32.totalorder %v635, 4
      %v658 = vsel %vm654, %v638, %v641
      %v659 = vsel %vm657, %v647, 2102212464
      %v660 = vsel %vm656, %v644, %v659
      %v661 = vsel %vm655, %v658, %v660
      %v662 = vsel %vm654, %v641, %v644
      %v663 = vsel %vm657, %v650, 920167782
      %v664 = vsel %vm656, %v647, %v663
      %v665 = vsel %vm655, %v662, %v664
      %v666 = vsel %vm654, %v644, %v647
      %v667 = vsel %vm657, %v653, 1326507024
      %v668 = vsel %vm656, %v650, %v667
      %v669 = vsel %vm655, %v666, %v668
      %v670 = vshll.u32 %v630, 8
      %v671 = vmul.u32.u64.compose %v670, %v669
      %v672 = vextract.low.u32 %v671
      %v673 = vextract.high.u32 %v671
      %v674 = vmul.u32.u64.compose %v670, %v665
      %v675 = vextract.low.u32 %v674
      %v676 = vextract.high.u32 %v674
      %v677 = vmul.u32 %v670, %v661
      %v678 = vadd.s32 %v673, %v675
      %vm679 = vc.u32 %v673, %v675
      %v680 = vadd.s32 %v676, 1
      %v681 = vsel %vm679, %v680, %v676
      %v682 = vadd.s32 %v677, %v681
      %v683 = vadd.s32 %v682, 536870912
      %v684 = vshrl.u32 %v683, 30
      %v685 = vshll.u32 %v684, 30
      %v686 = vsub.s32 %v682, %v685
      %vm687 = vcmp.lt.s32.totalorder %v686, 0
      %v688 = vsub.s32 0, %v686
      %v689 = vsel %vm687, %v688, %v686
      %v690 = vclz %v689
      %v691 = vsub.s32 %v690, 2
      %vm692 = vcmp.gt.s32.totalorder 0, %v691
      %v693 = vsel %vm692, 0, %v691
      %v694 = vsub.s32 32, %v693
      %v695 = vshll.u32 %v686, %v693
      %v696 = vshrl.u32 %v678, %v694
      %v697 = vor.u32 %v695, %v696
      %v698 = vsub.s32 4294967266, %v693
      %v699 = vadd.s32 %v698, 127
      %v700 = vshll.u32 %v699, 23
      %v701 = vor.u32 4788187, %v700
      %v702 = vand.u32 2147483647, %v701
      %v704 = vcvt.s32.f32 %v697
      %v705 = vmul.f32 %v704, %v702
      %v706 = vxor.u32 %v705, 2147483648
      %v707 = vsel %vm624, %v706, %v705
      %v708 = vsub.s32 4, %v684
      %v709 = vsel %vm624, %v708, %v684
      %v710 = vsel %vm623, %v206, %v707
      %v711 = vsel %vm623, 0, %v709
      %v712 = vcosq.f32.pop %v710
      %v713 = vsinq.f32.pop %v710
      %vm714 = vweird.f32 %v206
      %v715 = vand.u32 %v711, 3
      %vm716 = vcmp.lt.s32.totalorder %v715, 2
      %vm717 = vcmp.eq.s32.totalorder %v715, 0
      %v718 = vxor.u32 %v713, 2147483648
      %v719 = vsel %vm717, %v712, %v718
      %vm720 = vcmp.eq.s32.totalorder %v715, 2
      %v721 = vxor.u32 %v712, 2147483648
      %v722 = vsel %vm720, %v721, %v713
      %v723 = vsel %vm716, %v719, %v722
      %v724 = vsel %vm714, nan, %v723
      %v725 = vand.u32 2147483647, %v207
      %vm726 = vcmp.le.f32.partialorder %v725, 0.7853982
      %vm727 = vcmp.lt.s32.totalorder %v207, 0
      %v728 = vand.u32 %v207, 2139095040
      %v729 = vshrl.u32 %v728, 23
      %v730 = vsub.s32 %v729, 127
      %v731 = vand.u32 2147483647, %v207
      %v732 = vand.u32 %v731, 8388607
      %v733 = vor.u32 %v732, 8388608
      %v734 = vsub.s32 0, %v733
      %v735 = vadd.s32 %v730, 1
      %vm736 = vcmp.gt.s32.totalorder %v735, 0
      %v737 = vsel %vm736, %v735, 0
      %v738 = vshrl.u32 %v737, 5
      %v739 = vand.u32 %v737, 31
      %v740 = vsub.s32 32, %v739
      %v741 = vshrl.u32 683565275, %v740
      %v742 = vshll.u32 683565275, %v739
      %v743 = vshrl.u32 2475754826, %v740
      %v744 = vor.u32 %v742, %v743
      %v745 = vshll.u32 2475754826, %v739
      %v746 = vshrl.u32 2131351028, %v740
      %v747 = vor.u32 %v745, %v746
      %v748 = vshll.u32 2131351028, %v739
      %v749 = vshrl.u32 2102212464, %v740
      %v750 = vor.u32 %v748, %v749
      %v751 = vshll.u32 2102212464, %v739
      %v752 = vshrl.u32 920167782, %v740
      %v753 = vor.u32 %v751, %v752
      %v754 = vshll.u32 920167782, %v739
      %v755 = vshrl.u32 1326507024, %v740
      %v756 = vor.u32 %v754, %v755
      %vm757 = vcmp.lt.s32.totalorder %v738, 1
      %vm758 = vcmp.lt.s32.totalorder %v738, 2
      %vm759 = vcmp.lt.s32.totalorder %v738, 3
      %vm760 = vcmp.lt.s32.totalorder %v738, 4
      %v761 = vsel %vm757, %v741, %v744
      %v762 = vsel %vm760, %v750, 2102212464
      %v763 = vsel %vm759, %v747, %v762
      %v764 = vsel %vm758, %v761, %v763
      %v765 = vsel %vm757, %v744, %v747
      %v766 = vsel %vm760, %v753, 920167782
      %v767 = vsel %vm759, %v750, %v766
      %v768 = vsel %vm758, %v765, %v767
      %v769 = vsel %vm757, %v747, %v750
      %v770 = vsel %vm760, %v756, 1326507024
      %v771 = vsel %vm759, %v753, %v770
      %v772 = vsel %vm758, %v769, %v771
      %v773 = vshll.u32 %v733, 8
      %v774 = vmul.u32.u64.compose %v773, %v772
      %v775 = vextract.low.u32 %v774
      %v776 = vextract.high.u32 %v774
      %v777 = vmul.u32.u64.compose %v773, %v768
      %v778 = vextract.low.u32 %v777
      %v779 = vextract.high.u32 %v777
      %v780 = vmul.u32 %v773, %v764
      %v781 = vadd.s32 %v776, %v778
      %vm782 = vc.u32 %v776, %v778
      %v783 = vadd.s32 %v779, 1
      %v784 = vsel %vm782, %v783, %v779
      %v785 = vadd.s32 %v780, %v784
      %v786 = vadd.s32 %v785, 536870912
      %v787 = vshrl.u32 %v786, 30
      %v788 = vshll.u32 %v787, 30
      %v789 = vsub.s32 %v785, %v788
      %vm790 = vcmp.lt.s32.totalorder %v789, 0
      %v791 = vsub.s32 0, %v789
      %v792 = vsel %vm790, %v791, %v789
      %v793 = vclz %v792
      %v794 = vsub.s32 %v793, 2
      %vm795 = vcmp.gt.s32.totalorder 0, %v794
      %v796 = vsel %vm795, 0, %v794
      %v797 = vsub.s32 32, %v796
      %v798 = vshll.u32 %v789, %v796
      %v799 = vshrl.u32 %v781, %v797
      %v800 = vor.u32 %v798, %v799
      %v801 = vsub.s32 4294967266, %v796
      %v802 = vadd.s32 %v801, 127
      %v803 = vshll.u32 %v802, 23
      %v804 = vor.u32 4788187, %v803
      %v805 = vand.u32 2147483647, %v804
      %v807 = vcvt.s32.f32 %v800
      %v808 = vmul.f32 %v807, %v805
      %v809 = vxor.u32 %v808, 2147483648
      %v810 = vsel %vm727, %v809, %v808
      %v811 = vsub.s32 4, %v787
      %v812 = vsel %vm727, %v811, %v787
      %v813 = vsel %vm726, %v207, %v810
      %v814 = vsel %vm726, 0, %v812
      %v815 = vcosq.f32.pop %v813
      %v816 = vsinq.f32.pop %v813
      %vm817 = vweird.f32 %v207
      %v818 = vand.u32 %v814, 3
      %vm819 = vcmp.lt.s32.totalorder %v818, 2
      %vm820 = vcmp.eq.s32.totalorder %v818, 0
      %v821 = vxor.u32 %v816, 2147483648
      %v822 = vsel %vm820, %v815, %v821
      %vm823 = vcmp.eq.s32.totalorder %v818, 2
      %v824 = vxor.u32 %v815, 2147483648
      %v825 = vsel %vm823, %v824, %v816
      %v826 = vsel %vm819, %v822, %v825
      %v827 = vsel %vm817, nan, %v826
      %v828 = vand.u32 2147483647, %v208
      %vm829 = vcmp.le.f32.partialorder %v828, 0.7853982
      %vm830 = vcmp.lt.s32.totalorder %v208, 0
      %v831 = vand.u32 %v208, 2139095040
      %v832 = vshrl.u32 %v831, 23
      %v833 = vsub.s32 %v832, 127
      %v834 = vand.u32 2147483647, %v208
      %v835 = vand.u32 %v834, 8388607
      %v836 = vor.u32 %v835, 8388608
      %v837 = vsub.s32 0, %v836
      %v838 = vadd.s32 %v833, 1
      %vm839 = vcmp.gt.s32.totalorder %v838, 0
      %v840 = vsel %vm839, %v838, 0
      %v841 = vshrl.u32 %v840, 5
      %v842 = vand.u32 %v840, 31
      %v843 = vsub.s32 32, %v842
      %v844 = vshrl.u32 683565275, %v843
      %v845 = vshll.u32 683565275, %v842
      %v846 = vshrl.u32 2475754826, %v843
      %v847 = vor.u32 %v845, %v846
      %v848 = vshll.u32 2475754826, %v842
      %v849 = vshrl.u32 2131351028, %v843
      %v850 = vor.u32 %v848, %v849
      %v851 = vshll.u32 2131351028, %v842
      %v852 = vshrl.u32 2102212464, %v843
      %v853 = vor.u32 %v851, %v852
      %v854 = vshll.u32 2102212464, %v842
      %v855 = vshrl.u32 920167782, %v843
      %v856 = vor.u32 %v854, %v855
      %v857 = vshll.u32 920167782, %v842
      %v858 = vshrl.u32 1326507024, %v843
      %v859 = vor.u32 %v857, %v858
      %vm860 = vcmp.lt.s32.totalorder %v841, 1
      %vm861 = vcmp.lt.s32.totalorder %v841, 2
      %vm862 = vcmp.lt.s32.totalorder %v841, 3
      %vm863 = vcmp.lt.s32.totalorder %v841, 4
      %v864 = vsel %vm860, %v844, %v847
      %v865 = vsel %vm863, %v853, 2102212464
      %v866 = vsel %vm862, %v850, %v865
      %v867 = vsel %vm861, %v864, %v866
      %v868 = vsel %vm860, %v847, %v850
      %v869 = vsel %vm863, %v856, 920167782
      %v870 = vsel %vm862, %v853, %v869
      %v871 = vsel %vm861, %v868, %v870
      %v872 = vsel %vm860, %v850, %v853
      %v873 = vsel %vm863, %v859, 1326507024
      %v874 = vsel %vm862, %v856, %v873
      %v875 = vsel %vm861, %v872, %v874
      %v876 = vshll.u32 %v836, 8
      %v877 = vmul.u32.u64.compose %v876, %v875
      %v878 = vextract.low.u32 %v877
      %v879 = vextract.high.u32 %v877
      %v880 = vmul.u32.u64.compose %v876, %v871
      %v881 = vextract.low.u32 %v880
      %v882 = vextract.high.u32 %v880
      %v883 = vmul.u32 %v876, %v867
      %v884 = vadd.s32 %v879, %v881
      %vm885 = vc.u32 %v879, %v881
      %v886 = vadd.s32 %v882, 1
      %v887 = vsel %vm885, %v886, %v882
      %v888 = vadd.s32 %v883, %v887
      %v889 = vadd.s32 %v888, 536870912
      %v890 = vshrl.u32 %v889, 30
      %v891 = vshll.u32 %v890, 30
      %v892 = vsub.s32 %v888, %v891
      %vm893 = vcmp.lt.s32.totalorder %v892, 0
      %v894 = vsub.s32 0, %v892
      %v895 = vsel %vm893, %v894, %v892
      %v896 = vclz %v895
      %v897 = vsub.s32 %v896, 2
      %vm898 = vcmp.gt.s32.totalorder 0, %v897
      %v899 = vsel %vm898, 0, %v897
      %v900 = vsub.s32 32, %v899
      %v901 = vshll.u32 %v892, %v899
      %v902 = vshrl.u32 %v884, %v900
      %v903 = vor.u32 %v901, %v902
      %v904 = vsub.s32 4294967266, %v899
      %v905 = vadd.s32 %v904, 127
      %v906 = vshll.u32 %v905, 23
      %v907 = vor.u32 4788187, %v906
      %v908 = vand.u32 2147483647, %v907
      %v910 = vcvt.s32.f32 %v903
      %v911 = vmul.f32 %v910, %v908
      %v912 = vxor.u32 %v911, 2147483648
      %v913 = vsel %vm830, %v912, %v911
      %v914 = vsub.s32 4, %v890
      %v915 = vsel %vm830, %v914, %v890
      %v916 = vsel %vm829, %v208, %v913
      %v917 = vsel %vm829, 0, %v915
      %v918 = vcosq.f32.pop %v916
      %v919 = vsinq.f32.pop %v916
      %vm920 = vweird.f32 %v208
      %v921 = vand.u32 %v917, 3
      %vm922 = vcmp.lt.s32.totalorder %v921, 2
      %vm923 = vcmp.eq.s32.totalorder %v921, 0
      %v924 = vxor.u32 %v919, 2147483648
      %v925 = vsel %vm923, %v918, %v924
      %vm926 = vcmp.eq.s32.totalorder %v921, 2
      %v927 = vxor.u32 %v918, 2147483648
      %v928 = vsel %vm926, %v927, %v919
      %v929 = vsel %vm922, %v925, %v928
      %v930 = vsel %vm920, nan, %v929
      %v931 = vand.u32 2147483647, %v209
      %vm932 = vcmp.le.f32.partialorder %v931, 0.7853982
      %vm933 = vcmp.lt.s32.totalorder %v209, 0
      %v934 = vand.u32 %v209, 2139095040
      %v935 = vshrl.u32 %v934, 23
      %v936 = vsub.s32 %v935, 127
      %v937 = vand.u32 2147483647, %v209
      %v938 = vand.u32 %v937, 8388607
      %v939 = vor.u32 %v938, 8388608
      %v940 = vsub.s32 0, %v939
      %v941 = vadd.s32 %v936, 1
      %vm942 = vcmp.gt.s32.totalorder %v941, 0
      %v943 = vsel %vm942, %v941, 0
      %v944 = vshrl.u32 %v943, 5
      %v945 = vand.u32 %v943, 31
      %v946 = vsub.s32 32, %v945
      %v947 = vshrl.u32 683565275, %v946
      %v948 = vshll.u32 683565275, %v945
      %v949 = vshrl.u32 2475754826, %v946
      %v950 = vor.u32 %v948, %v949
      %v951 = vshll.u32 2475754826, %v945
      %v952 = vshrl.u32 2131351028, %v946
      %v953 = vor.u32 %v951, %v952
      %v954 = vshll.u32 2131351028, %v945
      %v955 = vshrl.u32 2102212464, %v946
      %v956 = vor.u32 %v954, %v955
      %v957 = vshll.u32 2102212464, %v945
      %v958 = vshrl.u32 920167782, %v946
      %v959 = vor.u32 %v957, %v958
      %v960 = vshll.u32 920167782, %v945
      %v961 = vshrl.u32 1326507024, %v946
      %v962 = vor.u32 %v960, %v961
      %vm963 = vcmp.lt.s32.totalorder %v944, 1
      %vm964 = vcmp.lt.s32.totalorder %v944, 2
      %vm965 = vcmp.lt.s32.totalorder %v944, 3
      %vm966 = vcmp.lt.s32.totalorder %v944, 4
      %v967 = vsel %vm963, %v947, %v950
      %v968 = vsel %vm966, %v956, 2102212464
      %v969 = vsel %vm965, %v953, %v968
      %v970 = vsel %vm964, %v967, %v969
      %v971 = vsel %vm963, %v950, %v953
      %v972 = vsel %vm966, %v959, 920167782
      %v973 = vsel %vm965, %v956, %v972
      %v974 = vsel %vm964, %v971, %v973
      %v975 = vsel %vm963, %v953, %v956
      %v976 = vsel %vm966, %v962, 1326507024
      %v977 = vsel %vm965, %v959, %v976
      %v978 = vsel %vm964, %v975, %v977
      %v979 = vshll.u32 %v939, 8
      %v980 = vmul.u32.u64.compose %v979, %v978
      %v981 = vextract.low.u32 %v980
      %v982 = vextract.high.u32 %v980
      %v983 = vmul.u32.u64.compose %v979, %v974
      %v984 = vextract.low.u32 %v983
      %v985 = vextract.high.u32 %v983
      %v986 = vmul.u32 %v979, %v970
      %v987 = vadd.s32 %v982, %v984
      %vm988 = vc.u32 %v982, %v984
      %v989 = vadd.s32 %v985, 1
      %v990 = vsel %vm988, %v989, %v985
      %v991 = vadd.s32 %v986, %v990
      %v992 = vadd.s32 %v991, 536870912
      %v993 = vshrl.u32 %v992, 30
      %v994 = vshll.u32 %v993, 30
      %v995 = vsub.s32 %v991, %v994
      %vm996 = vcmp.lt.s32.totalorder %v995, 0
      %v997 = vsub.s32 0, %v995
      %v998 = vsel %vm996, %v997, %v995
      %v999 = vclz %v998
      %v1000 = vsub.s32 %v999, 2
      %vm1001 = vcmp.gt.s32.totalorder 0, %v1000
      %v1002 = vsel %vm1001, 0, %v1000
      %v1003 = vsub.s32 32, %v1002
      %v1004 = vshll.u32 %v995, %v1002
      %v1005 = vshrl.u32 %v987, %v1003
      %v1006 = vor.u32 %v1004, %v1005
      %v1007 = vsub.s32 4294967266, %v1002
      %v1008 = vadd.s32 %v1007, 127
      %v1009 = vshll.u32 %v1008, 23
      %v1010 = vor.u32 4788187, %v1009
      %v1011 = vand.u32 2147483647, %v1010
      %v1013 = vcvt.s32.f32 %v1006
      %v1014 = vmul.f32 %v1013, %v1011
      %v1015 = vxor.u32 %v1014, 2147483648
      %v1016 = vsel %vm933, %v1015, %v1014
      %v1017 = vsub.s32 4, %v993
      %v1018 = vsel %vm933, %v1017, %v993
      %v1019 = vsel %vm932, %v209, %v1016
      %v1020 = vsel %vm932, 0, %v1018
      %v1021 = vcosq.f32.pop %v1019
      %v1022 = vsinq.f32.pop %v1019
      %vm1023 = vweird.f32 %v209
      %v1024 = vand.u32 %v1020, 3
      %vm1025 = vcmp.lt.s32.totalorder %v1024, 2
      %vm1026 = vcmp.eq.s32.totalorder %v1024, 0
      %v1027 = vxor.u32 %v1022, 2147483648
      %v1028 = vsel %vm1026, %v1021, %v1027
      %vm1029 = vcmp.eq.s32.totalorder %v1024, 2
      %v1030 = vxor.u32 %v1021, 2147483648
      %v1031 = vsel %vm1029, %v1030, %v1022
      %v1032 = vsel %vm1025, %v1028, %v1031
      %v1033 = vsel %vm1023, nan, %v1032
      %v1034 = vand.u32 2147483647, %v202
      %vm1035 = vcmp.le.f32.partialorder %v1034, 0.7853982
      %vm1036 = vcmp.lt.s32.totalorder %v202, 0
      %v1037 = vand.u32 %v202, 2139095040
      %v1038 = vshrl.u32 %v1037, 23
      %v1039 = vsub.s32 %v1038, 127
      %v1040 = vand.u32 2147483647, %v202
      %v1041 = vand.u32 %v1040, 8388607
      %v1042 = vor.u32 %v1041, 8388608
      %v1043 = vsub.s32 0, %v1042
      %v1044 = vadd.s32 %v1039, 1
      %vm1045 = vcmp.gt.s32.totalorder %v1044, 0
      %v1046 = vsel %vm1045, %v1044, 0
      %v1047 = vshrl.u32 %v1046, 5
      %v1048 = vand.u32 %v1046, 31
      %v1049 = vsub.s32 32, %v1048
      %v1050 = vshrl.u32 683565275, %v1049
      %v1051 = vshll.u32 683565275, %v1048
      %v1052 = vshrl.u32 2475754826, %v1049
      %v1053 = vor.u32 %v1051, %v1052
      %v1054 = vshll.u32 2475754826, %v1048
      %v1055 = vshrl.u32 2131351028, %v1049
      %v1056 = vor.u32 %v1054, %v1055
      %v1057 = vshll.u32 2131351028, %v1048
      %v1058 = vshrl.u32 2102212464, %v1049
      %v1059 = vor.u32 %v1057, %v1058
      %v1060 = vshll.u32 2102212464, %v1048
      %v1061 = vshrl.u32 920167782, %v1049
      %v1062 = vor.u32 %v1060, %v1061
      %v1063 = vshll.u32 920167782, %v1048
      %v1064 = vshrl.u32 1326507024, %v1049
      %v1065 = vor.u32 %v1063, %v1064
      %vm1066 = vcmp.lt.s32.totalorder %v1047, 1
      %vm1067 = vcmp.lt.s32.totalorder %v1047, 2
      %vm1068 = vcmp.lt.s32.totalorder %v1047, 3
      %vm1069 = vcmp.lt.s32.totalorder %v1047, 4
      %v1070 = vsel %vm1066, %v1050, %v1053
      %v1071 = vsel %vm1069, %v1059, 2102212464
      %v1072 = vsel %vm1068, %v1056, %v1071
      %v1073 = vsel %vm1067, %v1070, %v1072
      %v1074 = vsel %vm1066, %v1053, %v1056
      %v1075 = vsel %vm1069, %v1062, 920167782
      %v1076 = vsel %vm1068, %v1059, %v1075
      %v1077 = vsel %vm1067, %v1074, %v1076
      %v1078 = vsel %vm1066, %v1056, %v1059
      %v1079 = vsel %vm1069, %v1065, 1326507024
      %v1080 = vsel %vm1068, %v1062, %v1079
      %v1081 = vsel %vm1067, %v1078, %v1080
      %v1082 = vshll.u32 %v1042, 8
      %v1083 = vmul.u32.u64.compose %v1082, %v1081
      %v1084 = vextract.low.u32 %v1083
      %v1085 = vextract.high.u32 %v1083
      %v1086 = vmul.u32.u64.compose %v1082, %v1077
      %v1087 = vextract.low.u32 %v1086
      %v1088 = vextract.high.u32 %v1086
      %v1089 = vmul.u32 %v1082, %v1073
      %v1090 = vadd.s32 %v1085, %v1087
      %vm1091 = vc.u32 %v1085, %v1087
      %v1092 = vadd.s32 %v1088, 1
      %v1093 = vsel %vm1091, %v1092, %v1088
      %v1094 = vadd.s32 %v1089, %v1093
      %v1095 = vadd.s32 %v1094, 536870912
      %v1096 = vshrl.u32 %v1095, 30
      %v1097 = vshll.u32 %v1096, 30
      %v1098 = vsub.s32 %v1094, %v1097
      %vm1099 = vcmp.lt.s32.totalorder %v1098, 0
      %v1100 = vsub.s32 0, %v1098
      %v1101 = vsel %vm1099, %v1100, %v1098
      %v1102 = vclz %v1101
      %v1103 = vsub.s32 %v1102, 2
      %vm1104 = vcmp.gt.s32.totalorder 0, %v1103
      %v1105 = vsel %vm1104, 0, %v1103
      %v1106 = vsub.s32 32, %v1105
      %v1107 = vshll.u32 %v1098, %v1105
      %v1108 = vshrl.u32 %v1090, %v1106
      %v1109 = vor.u32 %v1107, %v1108
      %v1110 = vsub.s32 4294967266, %v1105
      %v1111 = vadd.s32 %v1110, 127
      %v1112 = vshll.u32 %v1111, 23
      %v1113 = vor.u32 4788187, %v1112
      %v1114 = vand.u32 2147483647, %v1113
      %v1116 = vcvt.s32.f32 %v1109
      %v1117 = vmul.f32 %v1116, %v1114
      %v1118 = vxor.u32 %v1117, 2147483648
      %v1119 = vsel %vm1036, %v1118, %v1117
      %v1120 = vsub.s32 4, %v1096
      %v1121 = vsel %vm1036, %v1120, %v1096
      %v1122 = vsel %vm1035, %v202, %v1119
      %v1123 = vsel %vm1035, 0, %v1121
      %v1124 = vcosq.f32.pop %v1122
      %v1125 = vsinq.f32.pop %v1122
      %vm1126 = vweird.f32 %v202
      %v1127 = vadd.s32 %v1123, 3
      %v1128 = vand.u32 %v1127, 3
      %vm1129 = vcmp.lt.s32.totalorder %v1128, 2
      %vm1130 = vcmp.eq.s32.totalorder %v1128, 0
      %v1131 = vxor.u32 %v1125, 2147483648
      %v1132 = vsel %vm1130, %v1124, %v1131
      %vm1133 = vcmp.eq.s32.totalorder %v1128, 2
      %v1134 = vxor.u32 %v1124, 2147483648
      %v1135 = vsel %vm1133, %v1134, %v1125
      %v1136 = vsel %vm1129, %v1132, %v1135
      %v1137 = vsel %vm1126, nan, %v1136
      %v1138 = vand.u32 2147483647, %v203
      %vm1139 = vcmp.le.f32.partialorder %v1138, 0.7853982
      %vm1140 = vcmp.lt.s32.totalorder %v203, 0
      %v1141 = vand.u32 %v203, 2139095040
      %v1142 = vshrl.u32 %v1141, 23
      %v1143 = vsub.s32 %v1142, 127
      %v1144 = vand.u32 2147483647, %v203
      %v1145 = vand.u32 %v1144, 8388607
      %v1146 = vor.u32 %v1145, 8388608
      %v1147 = vsub.s32 0, %v1146
      %v1148 = vadd.s32 %v1143, 1
      %vm1149 = vcmp.gt.s32.totalorder %v1148, 0
      %v1150 = vsel %vm1149, %v1148, 0
      %v1151 = vshrl.u32 %v1150, 5
      %v1152 = vand.u32 %v1150, 31
      %v1153 = vsub.s32 32, %v1152
      %v1154 = vshrl.u32 683565275, %v1153
      %v1155 = vshll.u32 683565275, %v1152
      %v1156 = vshrl.u32 2475754826, %v1153
      %v1157 = vor.u32 %v1155, %v1156
      %v1158 = vshll.u32 2475754826, %v1152
      %v1159 = vshrl.u32 2131351028, %v1153
      %v1160 = vor.u32 %v1158, %v1159
      %v1161 = vshll.u32 2131351028, %v1152
      %v1162 = vshrl.u32 2102212464, %v1153
      %v1163 = vor.u32 %v1161, %v1162
      %v1164 = vshll.u32 2102212464, %v1152
      %v1165 = vshrl.u32 920167782, %v1153
      %v1166 = vor.u32 %v1164, %v1165
      %v1167 = vshll.u32 920167782, %v1152
      %v1168 = vshrl.u32 1326507024, %v1153
      %v1169 = vor.u32 %v1167, %v1168
      %vm1170 = vcmp.lt.s32.totalorder %v1151, 1
      %vm1171 = vcmp.lt.s32.totalorder %v1151, 2
      %vm1172 = vcmp.lt.s32.totalorder %v1151, 3
      %vm1173 = vcmp.lt.s32.totalorder %v1151, 4
      %v1174 = vsel %vm1170, %v1154, %v1157
      %v1175 = vsel %vm1173, %v1163, 2102212464
      %v1176 = vsel %vm1172, %v1160, %v1175
      %v1177 = vsel %vm1171, %v1174, %v1176
      %v1178 = vsel %vm1170, %v1157, %v1160
      %v1179 = vsel %vm1173, %v1166, 920167782
      %v1180 = vsel %vm1172, %v1163, %v1179
      %v1181 = vsel %vm1171, %v1178, %v1180
      %v1182 = vsel %vm1170, %v1160, %v1163
      %v1183 = vsel %vm1173, %v1169, 1326507024
      %v1184 = vsel %vm1172, %v1166, %v1183
      %v1185 = vsel %vm1171, %v1182, %v1184
      %v1186 = vshll.u32 %v1146, 8
      %v1187 = vmul.u32.u64.compose %v1186, %v1185
      %v1188 = vextract.low.u32 %v1187
      %v1189 = vextract.high.u32 %v1187
      %v1190 = vmul.u32.u64.compose %v1186, %v1181
      %v1191 = vextract.low.u32 %v1190
      %v1192 = vextract.high.u32 %v1190
      %v1193 = vmul.u32 %v1186, %v1177
      %v1194 = vadd.s32 %v1189, %v1191
      %vm1195 = vc.u32 %v1189, %v1191
      %v1196 = vadd.s32 %v1192, 1
      %v1197 = vsel %vm1195, %v1196, %v1192
      %v1198 = vadd.s32 %v1193, %v1197
      %v1199 = vadd.s32 %v1198, 536870912
      %v1200 = vshrl.u32 %v1199, 30
      %v1201 = vshll.u32 %v1200, 30
      %v1202 = vsub.s32 %v1198, %v1201
      %vm1203 = vcmp.lt.s32.totalorder %v1202, 0
      %v1204 = vsub.s32 0, %v1202
      %v1205 = vsel %vm1203, %v1204, %v1202
      %v1206 = vclz %v1205
      %v1207 = vsub.s32 %v1206, 2
      %vm1208 = vcmp.gt.s32.totalorder 0, %v1207
      %v1209 = vsel %vm1208, 0, %v1207
      %v1210 = vsub.s32 32, %v1209
      %v1211 = vshll.u32 %v1202, %v1209
      %v1212 = vshrl.u32 %v1194, %v1210
      %v1213 = vor.u32 %v1211, %v1212
      %v1214 = vsub.s32 4294967266, %v1209
      %v1215 = vadd.s32 %v1214, 127
      %v1216 = vshll.u32 %v1215, 23
      %v1217 = vor.u32 4788187, %v1216
      %v1218 = vand.u32 2147483647, %v1217
      %v1220 = vcvt.s32.f32 %v1213
      %v1221 = vmul.f32 %v1220, %v1218
      %v1222 = vxor.u32 %v1221, 2147483648
      %v1223 = vsel %vm1140, %v1222, %v1221
      %v1224 = vsub.s32 4, %v1200
      %v1225 = vsel %vm1140, %v1224, %v1200
      %v1226 = vsel %vm1139, %v203, %v1223
      %v1227 = vsel %vm1139, 0, %v1225
      %v1228 = vcosq.f32.pop %v1226
      %v1229 = vsinq.f32.pop %v1226
      %vm1230 = vweird.f32 %v203
      %v1231 = vadd.s32 %v1227, 3
      %v1232 = vand.u32 %v1231, 3
      %vm1233 = vcmp.lt.s32.totalorder %v1232, 2
      %vm1234 = vcmp.eq.s32.totalorder %v1232, 0
      %v1235 = vxor.u32 %v1229, 2147483648
      %v1236 = vsel %vm1234, %v1228, %v1235
      %vm1237 = vcmp.eq.s32.totalorder %v1232, 2
      %v1238 = vxor.u32 %v1228, 2147483648
      %v1239 = vsel %vm1237, %v1238, %v1229
      %v1240 = vsel %vm1233, %v1236, %v1239
      %v1241 = vsel %vm1230, nan, %v1240
      %v1242 = vand.u32 2147483647, %v204
      %vm1243 = vcmp.le.f32.partialorder %v1242, 0.7853982
      %vm1244 = vcmp.lt.s32.totalorder %v204, 0
      %v1245 = vand.u32 %v204, 2139095040
      %v1246 = vshrl.u32 %v1245, 23
      %v1247 = vsub.s32 %v1246, 127
      %v1248 = vand.u32 2147483647, %v204
      %v1249 = vand.u32 %v1248, 8388607
      %v1250 = vor.u32 %v1249, 8388608
      %v1251 = vsub.s32 0, %v1250
      %v1252 = vadd.s32 %v1247, 1
      %vm1253 = vcmp.gt.s32.totalorder %v1252, 0
      %v1254 = vsel %vm1253, %v1252, 0
      %v1255 = vshrl.u32 %v1254, 5
      %v1256 = vand.u32 %v1254, 31
      %v1257 = vsub.s32 32, %v1256
      %v1258 = vshrl.u32 683565275, %v1257
      %v1259 = vshll.u32 683565275, %v1256
      %v1260 = vshrl.u32 2475754826, %v1257
      %v1261 = vor.u32 %v1259, %v1260
      %v1262 = vshll.u32 2475754826, %v1256
      %v1263 = vshrl.u32 2131351028, %v1257
      %v1264 = vor.u32 %v1262, %v1263
      %v1265 = vshll.u32 2131351028, %v1256
      %v1266 = vshrl.u32 2102212464, %v1257
      %v1267 = vor.u32 %v1265, %v1266
      %v1268 = vshll.u32 2102212464, %v1256
      %v1269 = vshrl.u32 920167782, %v1257
      %v1270 = vor.u32 %v1268, %v1269
      %v1271 = vshll.u32 920167782, %v1256
      %v1272 = vshrl.u32 1326507024, %v1257
      %v1273 = vor.u32 %v1271, %v1272
      %vm1274 = vcmp.lt.s32.totalorder %v1255, 1
      %vm1275 = vcmp.lt.s32.totalorder %v1255, 2
      %vm1276 = vcmp.lt.s32.totalorder %v1255, 3
      %vm1277 = vcmp.lt.s32.totalorder %v1255, 4
      %v1278 = vsel %vm1274, %v1258, %v1261
      %v1279 = vsel %vm1277, %v1267, 2102212464
      %v1280 = vsel %vm1276, %v1264, %v1279
      %v1281 = vsel %vm1275, %v1278, %v1280
      %v1282 = vsel %vm1274, %v1261, %v1264
      %v1283 = vsel %vm1277, %v1270, 920167782
      %v1284 = vsel %vm1276, %v1267, %v1283
      %v1285 = vsel %vm1275, %v1282, %v1284
      %v1286 = vsel %vm1274, %v1264, %v1267
      %v1287 = vsel %vm1277, %v1273, 1326507024
      %v1288 = vsel %vm1276, %v1270, %v1287
      %v1289 = vsel %vm1275, %v1286, %v1288
      %v1290 = vshll.u32 %v1250, 8
      %v1291 = vmul.u32.u64.compose %v1290, %v1289
      %v1292 = vextract.low.u32 %v1291
      %v1293 = vextract.high.u32 %v1291
      %v1294 = vmul.u32.u64.compose %v1290, %v1285
      %v1295 = vextract.low.u32 %v1294
      %v1296 = vextract.high.u32 %v1294
      %v1297 = vmul.u32 %v1290, %v1281
      %v1298 = vadd.s32 %v1293, %v1295
      %vm1299 = vc.u32 %v1293, %v1295
      %v1300 = vadd.s32 %v1296, 1
      %v1301 = vsel %vm1299, %v1300, %v1296
      %v1302 = vadd.s32 %v1297, %v1301
      %v1303 = vadd.s32 %v1302, 536870912
      %v1304 = vshrl.u32 %v1303, 30
      %v1305 = vshll.u32 %v1304, 30
      %v1306 = vsub.s32 %v1302, %v1305
      %vm1307 = vcmp.lt.s32.totalorder %v1306, 0
      %v1308 = vsub.s32 0, %v1306
      %v1309 = vsel %vm1307, %v1308, %v1306
      %v1310 = vclz %v1309
      %v1311 = vsub.s32 %v1310, 2
      %vm1312 = vcmp.gt.s32.totalorder 0, %v1311
      %v1313 = vsel %vm1312, 0, %v1311
      %v1314 = vsub.s32 32, %v1313
      %v1315 = vshll.u32 %v1306, %v1313
      %v1316 = vshrl.u32 %v1298, %v1314
      %v1317 = vor.u32 %v1315, %v1316
      %v1318 = vsub.s32 4294967266, %v1313
      %v1319 = vadd.s32 %v1318, 127
      %v1320 = vshll.u32 %v1319, 23
      %v1321 = vor.u32 4788187, %v1320
      %v1322 = vand.u32 2147483647, %v1321
      %v1324 = vcvt.s32.f32 %v1317
      %v1325 = vmul.f32 %v1324, %v1322
      %v1326 = vxor.u32 %v1325, 2147483648
      %v1327 = vsel %vm1244, %v1326, %v1325
      %v1328 = vsub.s32 4, %v1304
      %v1329 = vsel %vm1244, %v1328, %v1304
      %v1330 = vsel %vm1243, %v204, %v1327
      %v1331 = vsel %vm1243, 0, %v1329
      %v1332 = vcosq.f32.pop %v1330
      %v1333 = vsinq.f32.pop %v1330
      %vm1334 = vweird.f32 %v204
      %v1335 = vadd.s32 %v1331, 3
      %v1336 = vand.u32 %v1335, 3
      %vm1337 = vcmp.lt.s32.totalorder %v1336, 2
      %vm1338 = vcmp.eq.s32.totalorder %v1336, 0
      %v1339 = vxor.u32 %v1333, 2147483648
      %v1340 = vsel %vm1338, %v1332, %v1339
      %vm1341 = vcmp.eq.s32.totalorder %v1336, 2
      %v1342 = vxor.u32 %v1332, 2147483648
      %v1343 = vsel %vm1341, %v1342, %v1333
      %v1344 = vsel %vm1337, %v1340, %v1343
      %v1345 = vsel %vm1334, nan, %v1344
      %v1346 = vand.u32 2147483647, %v205
      %vm1347 = vcmp.le.f32.partialorder %v1346, 0.7853982
      %vm1348 = vcmp.lt.s32.totalorder %v205, 0
      %v1349 = vand.u32 %v205, 2139095040
      %v1350 = vshrl.u32 %v1349, 23
      %v1351 = vsub.s32 %v1350, 127
      %v1352 = vand.u32 2147483647, %v205
      %v1353 = vand.u32 %v1352, 8388607
      %v1354 = vor.u32 %v1353, 8388608
      %v1355 = vsub.s32 0, %v1354
      %v1356 = vadd.s32 %v1351, 1
      %vm1357 = vcmp.gt.s32.totalorder %v1356, 0
      %v1358 = vsel %vm1357, %v1356, 0
      %v1359 = vshrl.u32 %v1358, 5
      %v1360 = vand.u32 %v1358, 31
      %v1361 = vsub.s32 32, %v1360
      %v1362 = vshrl.u32 683565275, %v1361
      %v1363 = vshll.u32 683565275, %v1360
      %v1364 = vshrl.u32 2475754826, %v1361
      %v1365 = vor.u32 %v1363, %v1364
      %v1366 = vshll.u32 2475754826, %v1360
      %v1367 = vshrl.u32 2131351028, %v1361
      %v1368 = vor.u32 %v1366, %v1367
      %v1369 = vshll.u32 2131351028, %v1360
      %v1370 = vshrl.u32 2102212464, %v1361
      %v1371 = vor.u32 %v1369, %v1370
      %v1372 = vshll.u32 2102212464, %v1360
      %v1373 = vshrl.u32 920167782, %v1361
      %v1374 = vor.u32 %v1372, %v1373
      %v1375 = vshll.u32 920167782, %v1360
      %v1376 = vshrl.u32 1326507024, %v1361
      %v1377 = vor.u32 %v1375, %v1376
      %vm1378 = vcmp.lt.s32.totalorder %v1359, 1
      %vm1379 = vcmp.lt.s32.totalorder %v1359, 2
      %vm1380 = vcmp.lt.s32.totalorder %v1359, 3
      %vm1381 = vcmp.lt.s32.totalorder %v1359, 4
      %v1382 = vsel %vm1378, %v1362, %v1365
      %v1383 = vsel %vm1381, %v1371, 2102212464
      %v1384 = vsel %vm1380, %v1368, %v1383
      %v1385 = vsel %vm1379, %v1382, %v1384
      %v1386 = vsel %vm1378, %v1365, %v1368
      %v1387 = vsel %vm1381, %v1374, 920167782
      %v1388 = vsel %vm1380, %v1371, %v1387
      %v1389 = vsel %vm1379, %v1386, %v1388
      %v1390 = vsel %vm1378, %v1368, %v1371
      %v1391 = vsel %vm1381, %v1377, 1326507024
      %v1392 = vsel %vm1380, %v1374, %v1391
      %v1393 = vsel %vm1379, %v1390, %v1392
      %v1394 = vshll.u32 %v1354, 8
      %v1395 = vmul.u32.u64.compose %v1394, %v1393
      %v1396 = vextract.low.u32 %v1395
      %v1397 = vextract.high.u32 %v1395
      %v1398 = vmul.u32.u64.compose %v1394, %v1389
      %v1399 = vextract.low.u32 %v1398
      %v1400 = vextract.high.u32 %v1398
      %v1401 = vmul.u32 %v1394, %v1385
      %v1402 = vadd.s32 %v1397, %v1399
      %vm1403 = vc.u32 %v1397, %v1399
      %v1404 = vadd.s32 %v1400, 1
      %v1405 = vsel %vm1403, %v1404, %v1400
      %v1406 = vadd.s32 %v1401, %v1405
      %v1407 = vadd.s32 %v1406, 536870912
      %v1408 = vshrl.u32 %v1407, 30
      %v1409 = vshll.u32 %v1408, 30
      %v1410 = vsub.s32 %v1406, %v1409
      %vm1411 = vcmp.lt.s32.totalorder %v1410, 0
      %v1412 = vsub.s32 0, %v1410
      %v1413 = vsel %vm1411, %v1412, %v1410
      %v1414 = vclz %v1413
      %v1415 = vsub.s32 %v1414, 2
      %vm1416 = vcmp.gt.s32.totalorder 0, %v1415
      %v1417 = vsel %vm1416, 0, %v1415
      %v1418 = vsub.s32 32, %v1417
      %v1419 = vshll.u32 %v1410, %v1417
      %v1420 = vshrl.u32 %v1402, %v1418
      %v1421 = vor.u32 %v1419, %v1420
      %v1422 = vsub.s32 4294967266, %v1417
      %v1423 = vadd.s32 %v1422, 127
      %v1424 = vshll.u32 %v1423, 23
      %v1425 = vor.u32 4788187, %v1424
      %v1426 = vand.u32 2147483647, %v1425
      %v1428 = vcvt.s32.f32 %v1421
      %v1429 = vmul.f32 %v1428, %v1426
      %v1430 = vxor.u32 %v1429, 2147483648
      %v1431 = vsel %vm1348, %v1430, %v1429
      %v1432 = vsub.s32 4, %v1408
      %v1433 = vsel %vm1348, %v1432, %v1408
      %v1434 = vsel %vm1347, %v205, %v1431
      %v1435 = vsel %vm1347, 0, %v1433
      %v1436 = vcosq.f32.pop %v1434
      %v1437 = vsinq.f32.pop %v1434
      %vm1438 = vweird.f32 %v205
      %v1439 = vadd.s32 %v1435, 3
      %v1440 = vand.u32 %v1439, 3
      %vm1441 = vcmp.lt.s32.totalorder %v1440, 2
      %vm1442 = vcmp.eq.s32.totalorder %v1440, 0
      %v1443 = vxor.u32 %v1437, 2147483648
      %v1444 = vsel %vm1442, %v1436, %v1443
      %vm1445 = vcmp.eq.s32.totalorder %v1440, 2
      %v1446 = vxor.u32 %v1436, 2147483648
      %v1447 = vsel %vm1445, %v1446, %v1437
      %v1448 = vsel %vm1441, %v1444, %v1447
      %v1449 = vsel %vm1438, nan, %v1448
      %v1450 = vand.u32 2147483647, %v206
      %vm1451 = vcmp.le.f32.partialorder %v1450, 0.7853982
      %vm1452 = vcmp.lt.s32.totalorder %v206, 0
      %v1453 = vand.u32 %v206, 2139095040
      %v1454 = vshrl.u32 %v1453, 23
      %v1455 = vsub.s32 %v1454, 127
      %v1456 = vand.u32 2147483647, %v206
      %v1457 = vand.u32 %v1456, 8388607
      %v1458 = vor.u32 %v1457, 8388608
      %v1459 = vsub.s32 0, %v1458
      %v1460 = vadd.s32 %v1455, 1
      %vm1461 = vcmp.gt.s32.totalorder %v1460, 0
      %v1462 = vsel %vm1461, %v1460, 0
      %v1463 = vshrl.u32 %v1462, 5
      %v1464 = vand.u32 %v1462, 31
      %v1465 = vsub.s32 32, %v1464
      %v1466 = vshrl.u32 683565275, %v1465
      %v1467 = vshll.u32 683565275, %v1464
      %v1468 = vshrl.u32 2475754826, %v1465
      %v1469 = vor.u32 %v1467, %v1468
      %v1470 = vshll.u32 2475754826, %v1464
      %v1471 = vshrl.u32 2131351028, %v1465
      %v1472 = vor.u32 %v1470, %v1471
      %v1473 = vshll.u32 2131351028, %v1464
      %v1474 = vshrl.u32 2102212464, %v1465
      %v1475 = vor.u32 %v1473, %v1474
      %v1476 = vshll.u32 2102212464, %v1464
      %v1477 = vshrl.u32 920167782, %v1465
      %v1478 = vor.u32 %v1476, %v1477
      %v1479 = vshll.u32 920167782, %v1464
      %v1480 = vshrl.u32 1326507024, %v1465
      %v1481 = vor.u32 %v1479, %v1480
      %vm1482 = vcmp.lt.s32.totalorder %v1463, 1
      %vm1483 = vcmp.lt.s32.totalorder %v1463, 2
      %vm1484 = vcmp.lt.s32.totalorder %v1463, 3
      %vm1485 = vcmp.lt.s32.totalorder %v1463, 4
      %v1486 = vsel %vm1482, %v1466, %v1469
      %v1487 = vsel %vm1485, %v1475, 2102212464
      %v1488 = vsel %vm1484, %v1472, %v1487
      %v1489 = vsel %vm1483, %v1486, %v1488
      %v1490 = vsel %vm1482, %v1469, %v1472
      %v1491 = vsel %vm1485, %v1478, 920167782
      %v1492 = vsel %vm1484, %v1475, %v1491
      %v1493 = vsel %vm1483, %v1490, %v1492
      %v1494 = vsel %vm1482, %v1472, %v1475
      %v1495 = vsel %vm1485, %v1481, 1326507024
      %v1496 = vsel %vm1484, %v1478, %v1495
      %v1497 = vsel %vm1483, %v1494, %v1496
      %v1498 = vshll.u32 %v1458, 8
      %v1499 = vmul.u32.u64.compose %v1498, %v1497
      %v1500 = vextract.low.u32 %v1499
      %v1501 = vextract.high.u32 %v1499
      %v1502 = vmul.u32.u64.compose %v1498, %v1493
      %v1503 = vextract.low.u32 %v1502
      %v1504 = vextract.high.u32 %v1502
      %v1505 = vmul.u32 %v1498, %v1489
      %v1506 = vadd.s32 %v1501, %v1503
      %vm1507 = vc.u32 %v1501, %v1503
      %v1508 = vadd.s32 %v1504, 1
      %v1509 = vsel %vm1507, %v1508, %v1504
      %v1510 = vadd.s32 %v1505, %v1509
      %v1511 = vadd.s32 %v1510, 536870912
      %v1512 = vshrl.u32 %v1511, 30
      %v1513 = vshll.u32 %v1512, 30
      %v1514 = vsub.s32 %v1510, %v1513
      %vm1515 = vcmp.lt.s32.totalorder %v1514, 0
      %v1516 = vsub.s32 0, %v1514
      %v1517 = vsel %vm1515, %v1516, %v1514
      %v1518 = vclz %v1517
      %v1519 = vsub.s32 %v1518, 2
      %vm1520 = vcmp.gt.s32.totalorder 0, %v1519
      %v1521 = vsel %vm1520, 0, %v1519
      %v1522 = vsub.s32 32, %v1521
      %v1523 = vshll.u32 %v1514, %v1521
      %v1524 = vshrl.u32 %v1506, %v1522
      %v1525 = vor.u32 %v1523, %v1524
      %v1526 = vsub.s32 4294967266, %v1521
      %v1527 = vadd.s32 %v1526, 127
      %v1528 = vshll.u32 %v1527, 23
      %v1529 = vor.u32 4788187, %v1528
      %v1530 = vand.u32 2147483647, %v1529
      %v1532 = vcvt.s32.f32 %v1525
      %v1533 = vmul.f32 %v1532, %v1530
      %v1534 = vxor.u32 %v1533, 2147483648
      %v1535 = vsel %vm1452, %v1534, %v1533
      %v1536 = vsub.s32 4, %v1512
      %v1537 = vsel %vm1452, %v1536, %v1512
      %v1538 = vsel %vm1451, %v206, %v1535
      %v1539 = vsel %vm1451, 0, %v1537
      %v1540 = vcosq.f32.pop %v1538
      %v1541 = vsinq.f32.pop %v1538
      %vm1542 = vweird.f32 %v206
      %v1543 = vadd.s32 %v1539, 3
      %v1544 = vand.u32 %v1543, 3
      %vm1545 = vcmp.lt.s32.totalorder %v1544, 2
      %vm1546 = vcmp.eq.s32.totalorder %v1544, 0
      %v1547 = vxor.u32 %v1541, 2147483648
      %v1548 = vsel %vm1546, %v1540, %v1547
      %vm1549 = vcmp.eq.s32.totalorder %v1544, 2
      %v1550 = vxor.u32 %v1540, 2147483648
      %v1551 = vsel %vm1549, %v1550, %v1541
      %v1552 = vsel %vm1545, %v1548, %v1551
      %v1553 = vsel %vm1542, nan, %v1552
      %v1554 = vand.u32 2147483647, %v207
      %vm1555 = vcmp.le.f32.partialorder %v1554, 0.7853982
      %vm1556 = vcmp.lt.s32.totalorder %v207, 0
      %v1557 = vand.u32 %v207, 2139095040
      %v1558 = vshrl.u32 %v1557, 23
      %v1559 = vsub.s32 %v1558, 127
      %v1560 = vand.u32 2147483647, %v207
      %v1561 = vand.u32 %v1560, 8388607
      %v1562 = vor.u32 %v1561, 8388608
      %v1563 = vsub.s32 0, %v1562
      %v1564 = vadd.s32 %v1559, 1
      %vm1565 = vcmp.gt.s32.totalorder %v1564, 0
      %v1566 = vsel %vm1565, %v1564, 0
      %v1567 = vshrl.u32 %v1566, 5
      %v1568 = vand.u32 %v1566, 31
      %v1569 = vsub.s32 32, %v1568
      %v1570 = vshrl.u32 683565275, %v1569
      %v1571 = vshll.u32 683565275, %v1568
      %v1572 = vshrl.u32 2475754826, %v1569
      %v1573 = vor.u32 %v1571, %v1572
      %v1574 = vshll.u32 2475754826, %v1568
      %v1575 = vshrl.u32 2131351028, %v1569
      %v1576 = vor.u32 %v1574, %v1575
      %v1577 = vshll.u32 2131351028, %v1568
      %v1578 = vshrl.u32 2102212464, %v1569
      %v1579 = vor.u32 %v1577, %v1578
      %v1580 = vshll.u32 2102212464, %v1568
      %v1581 = vshrl.u32 920167782, %v1569
      %v1582 = vor.u32 %v1580, %v1581
      %v1583 = vshll.u32 920167782, %v1568
      %v1584 = vshrl.u32 1326507024, %v1569
      %v1585 = vor.u32 %v1583, %v1584
      %vm1586 = vcmp.lt.s32.totalorder %v1567, 1
      %vm1587 = vcmp.lt.s32.totalorder %v1567, 2
      %vm1588 = vcmp.lt.s32.totalorder %v1567, 3
      %vm1589 = vcmp.lt.s32.totalorder %v1567, 4
      %v1590 = vsel %vm1586, %v1570, %v1573
      %v1591 = vsel %vm1589, %v1579, 2102212464
      %v1592 = vsel %vm1588, %v1576, %v1591
      %v1593 = vsel %vm1587, %v1590, %v1592
      %v1594 = vsel %vm1586, %v1573, %v1576
      %v1595 = vsel %vm1589, %v1582, 920167782
      %v1596 = vsel %vm1588, %v1579, %v1595
      %v1597 = vsel %vm1587, %v1594, %v1596
      %v1598 = vsel %vm1586, %v1576, %v1579
      %v1599 = vsel %vm1589, %v1585, 1326507024
      %v1600 = vsel %vm1588, %v1582, %v1599
      %v1601 = vsel %vm1587, %v1598, %v1600
      %v1602 = vshll.u32 %v1562, 8
      %v1603 = vmul.u32.u64.compose %v1602, %v1601
      %v1604 = vextract.low.u32 %v1603
      %v1605 = vextract.high.u32 %v1603
      %v1606 = vmul.u32.u64.compose %v1602, %v1597
      %v1607 = vextract.low.u32 %v1606
      %v1608 = vextract.high.u32 %v1606
      %v1609 = vmul.u32 %v1602, %v1593
      %v1610 = vadd.s32 %v1605, %v1607
      %vm1611 = vc.u32 %v1605, %v1607
      %v1612 = vadd.s32 %v1608, 1
      %v1613 = vsel %vm1611, %v1612, %v1608
      %v1614 = vadd.s32 %v1609, %v1613
      %v1615 = vadd.s32 %v1614, 536870912
      %v1616 = vshrl.u32 %v1615, 30
      %v1617 = vshll.u32 %v1616, 30
      %v1618 = vsub.s32 %v1614, %v1617
      %vm1619 = vcmp.lt.s32.totalorder %v1618, 0
      %v1620 = vsub.s32 0, %v1618
      %v1621 = vsel %vm1619, %v1620, %v1618
      %v1622 = vclz %v1621
      %v1623 = vsub.s32 %v1622, 2
      %vm1624 = vcmp.gt.s32.totalorder 0, %v1623
      %v1625 = vsel %vm1624, 0, %v1623
      %v1626 = vsub.s32 32, %v1625
      %v1627 = vshll.u32 %v1618, %v1625
      %v1628 = vshrl.u32 %v1610, %v1626
      %v1629 = vor.u32 %v1627, %v1628
      %v1630 = vsub.s32 4294967266, %v1625
      %v1631 = vadd.s32 %v1630, 127
      %v1632 = vshll.u32 %v1631, 23
      %v1633 = vor.u32 4788187, %v1632
      %v1634 = vand.u32 2147483647, %v1633
      %v1636 = vcvt.s32.f32 %v1629
      %v1637 = vmul.f32 %v1636, %v1634
      %v1638 = vxor.u32 %v1637, 2147483648
      %v1639 = vsel %vm1556, %v1638, %v1637
      %v1640 = vsub.s32 4, %v1616
      %v1641 = vsel %vm1556, %v1640, %v1616
      %v1642 = vsel %vm1555, %v207, %v1639
      %v1643 = vsel %vm1555, 0, %v1641
      %v1644 = vcosq.f32.pop %v1642
      %v1645 = vsinq.f32.pop %v1642
      %vm1646 = vweird.f32 %v207
      %v1647 = vadd.s32 %v1643, 3
      %v1648 = vand.u32 %v1647, 3
      %vm1649 = vcmp.lt.s32.totalorder %v1648, 2
      %vm1650 = vcmp.eq.s32.totalorder %v1648, 0
      %v1651 = vxor.u32 %v1645, 2147483648
      %v1652 = vsel %vm1650, %v1644, %v1651
      %vm1653 = vcmp.eq.s32.totalorder %v1648, 2
      %v1654 = vxor.u32 %v1644, 2147483648
      %v1655 = vsel %vm1653, %v1654, %v1645
      %v1656 = vsel %vm1649, %v1652, %v1655
      %v1657 = vsel %vm1646, nan, %v1656
      %v1658 = vand.u32 2147483647, %v208
      %vm1659 = vcmp.le.f32.partialorder %v1658, 0.7853982
      %vm1660 = vcmp.lt.s32.totalorder %v208, 0
      %v1661 = vand.u32 %v208, 2139095040
      %v1662 = vshrl.u32 %v1661, 23
      %v1663 = vsub.s32 %v1662, 127
      %v1664 = vand.u32 2147483647, %v208
      %v1665 = vand.u32 %v1664, 8388607
      %v1666 = vor.u32 %v1665, 8388608
      %v1667 = vsub.s32 0, %v1666
      %v1668 = vadd.s32 %v1663, 1
      %vm1669 = vcmp.gt.s32.totalorder %v1668, 0
      %v1670 = vsel %vm1669, %v1668, 0
      %v1671 = vshrl.u32 %v1670, 5
      %v1672 = vand.u32 %v1670, 31
      %v1673 = vsub.s32 32, %v1672
      %v1674 = vshrl.u32 683565275, %v1673
      %v1675 = vshll.u32 683565275, %v1672
      %v1676 = vshrl.u32 2475754826, %v1673
      %v1677 = vor.u32 %v1675, %v1676
      %v1678 = vshll.u32 2475754826, %v1672
      %v1679 = vshrl.u32 2131351028, %v1673
      %v1680 = vor.u32 %v1678, %v1679
      %v1681 = vshll.u32 2131351028, %v1672
      %v1682 = vshrl.u32 2102212464, %v1673
      %v1683 = vor.u32 %v1681, %v1682
      %v1684 = vshll.u32 2102212464, %v1672
      %v1685 = vshrl.u32 920167782, %v1673
      %v1686 = vor.u32 %v1684, %v1685
      %v1687 = vshll.u32 920167782, %v1672
      %v1688 = vshrl.u32 1326507024, %v1673
      %v1689 = vor.u32 %v1687, %v1688
      %vm1690 = vcmp.lt.s32.totalorder %v1671, 1
      %vm1691 = vcmp.lt.s32.totalorder %v1671, 2
      %vm1692 = vcmp.lt.s32.totalorder %v1671, 3
      %vm1693 = vcmp.lt.s32.totalorder %v1671, 4
      %v1694 = vsel %vm1690, %v1674, %v1677
      %v1695 = vsel %vm1693, %v1683, 2102212464
      %v1696 = vsel %vm1692, %v1680, %v1695
      %v1697 = vsel %vm1691, %v1694, %v1696
      %v1698 = vsel %vm1690, %v1677, %v1680
      %v1699 = vsel %vm1693, %v1686, 920167782
      %v1700 = vsel %vm1692, %v1683, %v1699
      %v1701 = vsel %vm1691, %v1698, %v1700
      %v1702 = vsel %vm1690, %v1680, %v1683
      %v1703 = vsel %vm1693, %v1689, 1326507024
      %v1704 = vsel %vm1692, %v1686, %v1703
      %v1705 = vsel %vm1691, %v1702, %v1704
      %v1706 = vshll.u32 %v1666, 8
      %v1707 = vmul.u32.u64.compose %v1706, %v1705
      %v1708 = vextract.low.u32 %v1707
      %v1709 = vextract.high.u32 %v1707
      %v1710 = vmul.u32.u64.compose %v1706, %v1701
      %v1711 = vextract.low.u32 %v1710
      %v1712 = vextract.high.u32 %v1710
      %v1713 = vmul.u32 %v1706, %v1697
      %v1714 = vadd.s32 %v1709, %v1711
      %vm1715 = vc.u32 %v1709, %v1711
      %v1716 = vadd.s32 %v1712, 1
      %v1717 = vsel %vm1715, %v1716, %v1712
      %v1718 = vadd.s32 %v1713, %v1717
      %v1719 = vadd.s32 %v1718, 536870912
      %v1720 = vshrl.u32 %v1719, 30
      %v1721 = vshll.u32 %v1720, 30
      %v1722 = vsub.s32 %v1718, %v1721
      %vm1723 = vcmp.lt.s32.totalorder %v1722, 0
      %v1724 = vsub.s32 0, %v1722
      %v1725 = vsel %vm1723, %v1724, %v1722
      %v1726 = vclz %v1725
      %v1727 = vsub.s32 %v1726, 2
      %vm1728 = vcmp.gt.s32.totalorder 0, %v1727
      %v1729 = vsel %vm1728, 0, %v1727
      %v1730 = vsub.s32 32, %v1729
      %v1731 = vshll.u32 %v1722, %v1729
      %v1732 = vshrl.u32 %v1714, %v1730
      %v1733 = vor.u32 %v1731, %v1732
      %v1734 = vsub.s32 4294967266, %v1729
      %v1735 = vadd.s32 %v1734, 127
      %v1736 = vshll.u32 %v1735, 23
      %v1737 = vor.u32 4788187, %v1736
      %v1738 = vand.u32 2147483647, %v1737
      %v1740 = vcvt.s32.f32 %v1733
      %v1741 = vmul.f32 %v1740, %v1738
      %v1742 = vxor.u32 %v1741, 2147483648
      %v1743 = vsel %vm1660, %v1742, %v1741
      %v1744 = vsub.s32 4, %v1720
      %v1745 = vsel %vm1660, %v1744, %v1720
      %v1746 = vsel %vm1659, %v208, %v1743
      %v1747 = vsel %vm1659, 0, %v1745
      %v1748 = vcosq.f32.pop %v1746
      %v1749 = vsinq.f32.pop %v1746
      %vm1750 = vweird.f32 %v208
      %v1751 = vadd.s32 %v1747, 3
      %v1752 = vand.u32 %v1751, 3
      %vm1753 = vcmp.lt.s32.totalorder %v1752, 2
      %vm1754 = vcmp.eq.s32.totalorder %v1752, 0
      %v1755 = vxor.u32 %v1749, 2147483648
      %v1756 = vsel %vm1754, %v1748, %v1755
      %vm1757 = vcmp.eq.s32.totalorder %v1752, 2
      %v1758 = vxor.u32 %v1748, 2147483648
      %v1759 = vsel %vm1757, %v1758, %v1749
      %v1760 = vsel %vm1753, %v1756, %v1759
      %v1761 = vsel %vm1750, nan, %v1760
      %v1762 = vand.u32 2147483647, %v209
      %vm1763 = vcmp.le.f32.partialorder %v1762, 0.7853982
      %vm1764 = vcmp.lt.s32.totalorder %v209, 0
      %v1765 = vand.u32 %v209, 2139095040
      %v1766 = vshrl.u32 %v1765, 23
      %v1767 = vsub.s32 %v1766, 127
      %v1768 = vand.u32 2147483647, %v209
      %v1769 = vand.u32 %v1768, 8388607
      %v1770 = vor.u32 %v1769, 8388608
      %v1771 = vsub.s32 0, %v1770
      %v1772 = vadd.s32 %v1767, 1
      %vm1773 = vcmp.gt.s32.totalorder %v1772, 0
      %v1774 = vsel %vm1773, %v1772, 0
      %v1775 = vshrl.u32 %v1774, 5
      %v1776 = vand.u32 %v1774, 31
      %v1777 = vsub.s32 32, %v1776
      %v1778 = vshrl.u32 683565275, %v1777
      %v1779 = vshll.u32 683565275, %v1776
      %v1780 = vshrl.u32 2475754826, %v1777
      %v1781 = vor.u32 %v1779, %v1780
      %v1782 = vshll.u32 2475754826, %v1776
      %v1783 = vshrl.u32 2131351028, %v1777
      %v1784 = vor.u32 %v1782, %v1783
      %v1785 = vshll.u32 2131351028, %v1776
      %v1786 = vshrl.u32 2102212464, %v1777
      %v1787 = vor.u32 %v1785, %v1786
      %v1788 = vshll.u32 2102212464, %v1776
      %v1789 = vshrl.u32 920167782, %v1777
      %v1790 = vor.u32 %v1788, %v1789
      %v1791 = vshll.u32 920167782, %v1776
      %v1792 = vshrl.u32 1326507024, %v1777
      %v1793 = vor.u32 %v1791, %v1792
      %vm1794 = vcmp.lt.s32.totalorder %v1775, 1
      %vm1795 = vcmp.lt.s32.totalorder %v1775, 2
      %vm1796 = vcmp.lt.s32.totalorder %v1775, 3
      %vm1797 = vcmp.lt.s32.totalorder %v1775, 4
      %v1798 = vsel %vm1794, %v1778, %v1781
      %v1799 = vsel %vm1797, %v1787, 2102212464
      %v1800 = vsel %vm1796, %v1784, %v1799
      %v1801 = vsel %vm1795, %v1798, %v1800
      %v1802 = vsel %vm1794, %v1781, %v1784
      %v1803 = vsel %vm1797, %v1790, 920167782
      %v1804 = vsel %vm1796, %v1787, %v1803
      %v1805 = vsel %vm1795, %v1802, %v1804
      %v1806 = vsel %vm1794, %v1784, %v1787
      %v1807 = vsel %vm1797, %v1793, 1326507024
      %v1808 = vsel %vm1796, %v1790, %v1807
      %v1809 = vsel %vm1795, %v1806, %v1808
      %v1810 = vshll.u32 %v1770, 8
      %v1811 = vmul.u32.u64.compose %v1810, %v1809
      %v1812 = vextract.low.u32 %v1811
      %v1813 = vextract.high.u32 %v1811
      %v1814 = vmul.u32.u64.compose %v1810, %v1805
      %v1815 = vextract.low.u32 %v1814
      %v1816 = vextract.high.u32 %v1814
      %v1817 = vmul.u32 %v1810, %v1801
      %v1818 = vadd.s32 %v1813, %v1815
      %vm1819 = vc.u32 %v1813, %v1815
      %v1820 = vadd.s32 %v1816, 1
      %v1821 = vsel %vm1819, %v1820, %v1816
      %v1822 = vadd.s32 %v1817, %v1821
      %v1823 = vadd.s32 %v1822, 536870912
      %v1824 = vshrl.u32 %v1823, 30
      %v1825 = vshll.u32 %v1824, 30
      %v1826 = vsub.s32 %v1822, %v1825
      %vm1827 = vcmp.lt.s32.totalorder %v1826, 0
      %v1828 = vsub.s32 0, %v1826
      %v1829 = vsel %vm1827, %v1828, %v1826
      %v1830 = vclz %v1829
      %v1831 = vsub.s32 %v1830, 2
      %vm1832 = vcmp.gt.s32.totalorder 0, %v1831
      %v1833 = vsel %vm1832, 0, %v1831
      %v1834 = vsub.s32 32, %v1833
      %v1835 = vshll.u32 %v1826, %v1833
      %v1836 = vshrl.u32 %v1818, %v1834
      %v1837 = vor.u32 %v1835, %v1836
      %v1838 = vsub.s32 4294967266, %v1833
      %v1839 = vadd.s32 %v1838, 127
      %v1840 = vshll.u32 %v1839, 23
      %v1841 = vor.u32 4788187, %v1840
      %v1842 = vand.u32 2147483647, %v1841
      %v1844 = vcvt.s32.f32 %v1837
      %v1845 = vmul.f32 %v1844, %v1842
      %v1846 = vxor.u32 %v1845, 2147483648
      %v1847 = vsel %vm1764, %v1846, %v1845
      %v1848 = vsub.s32 4, %v1824
      %v1849 = vsel %vm1764, %v1848, %v1824
      %v1850 = vsel %vm1763, %v209, %v1847
      %v1851 = vsel %vm1763, 0, %v1849
      %v1852 = vcosq.f32.pop %v1850
      %v1853 = vsinq.f32.pop %v1850
      %vm1854 = vweird.f32 %v209
      %v1855 = vadd.s32 %v1851, 3
      %v1856 = vand.u32 %v1855, 3
      %vm1857 = vcmp.lt.s32.totalorder %v1856, 2
      %vm1858 = vcmp.eq.s32.totalorder %v1856, 0
      %v1859 = vxor.u32 %v1853, 2147483648
      %v1860 = vsel %vm1858, %v1852, %v1859
      %vm1861 = vcmp.eq.s32.totalorder %v1856, 2
      %v1862 = vxor.u32 %v1852, 2147483648
      %v1863 = vsel %vm1861, %v1862, %v1853
      %v1864 = vsel %vm1857, %v1860, %v1863
      %v1865 = vsel %vm1854, nan, %v1864
      %1874 = vrot.lane.b32.xlu0 %v1137, 16
      %v1875 = vpop.permute.xlu0 %1874
      %1876 = vrot.lane.b32.xlu0 %v1241, 16
      %v1877 = vpop.permute.xlu0 %1876
      %1878 = vrot.lane.b32.xlu0 %v1345, 16
      %v1879 = vpop.permute.xlu0 %1878
      %1880 = vrot.lane.b32.xlu0 %v1449, 16
      %v1881 = vpop.permute.xlu0 %1880
      %1882 = vrot.lane.b32.xlu0 %v1553, 16
      %v1883 = vpop.permute.xlu0 %1882
      %1884 = vrot.lane.b32.xlu0 %v1657, 16
      %v1885 = vpop.permute.xlu0 %1884
      %1886 = vrot.lane.b32.xlu0 %v1761, 16
      %v1887 = vpop.permute.xlu0 %1886
      %1888 = vrot.lane.b32.xlu0 %v1865, 16
      %v1889 = vpop.permute.xlu0 %1888
      %vm1898 = vcmask 130048
      %v1899 = vsel %vm1898, %v312, %v1875
      %v1900 = vsel %vm1898, %v415, %v1877
      %v1901 = vsel %vm1898, %v518, %v1879
      %v1902 = vsel %vm1898, %v621, %v1881
      %v1903 = vsel %vm1898, %v724, %v1883
      %v1904 = vsel %vm1898, %v827, %v1885
      %v1905 = vsel %vm1898, %v930, %v1887
      %v1906 = vsel %vm1898, %v1033, %v1889
      %vm1907 = vcmask 261120
      %1908 = vst.msk [vmem:[%s145] sm:$0xff] %vm1907, %v1899
      %1909 = vst.msk [vmem:[%s145 + $0x8] sm:$0xff] %vm1907, %v1900
      %1910 = vst.msk [vmem:[%s145 + $0x10] sm:$0xff] %vm1907, %v1901
      %1911 = vst.msk [vmem:[%s145 + $0x18] sm:$0xff] %vm1907, %v1902
      %1912 = vst.msk [vmem:[%s145 + $0x20] sm:$0xff] %vm1907, %v1903
      %1913 = vst.msk [vmem:[%s145 + $0x28] sm:$0xff] %vm1907, %v1904
      %1914 = vst.msk [vmem:[%s145 + $0x30] sm:$0xff] %vm1907, %v1905
      %1915 = vst.msk [vmem:[%s145 + $0x38] sm:$0xff] %vm1907, %v1906
      %s1916 = smul.u32 8, %s13
      %p1917 = scmp.lt.s32.totalorder %s1916, 15
      %s1918 = scalar_select %p1917, %s1916, 15
      %s1919 = smul.addr %s1918, 8
      %s1920 = scalar_lea.vmem %s2, %s1919
      // Predicated region
      $region29: #{tpu_custom_call.1} parent=27 // pred_check
        %p1921 = pneg %p78
      $region30: #{tpu_custom_call.1} parent=27 // pred_check_branch
        %1923 = sbr.rel (%p1921) target = $region32
      $region31: #{tpu_custom_call.1} parent=27 // pred_region
        %s1924 = smul.u32 8, %s13
      $region32: #{tpu_custom_call.1} parent=27 // pred_fallthru
        _
    $region28: #{tpu_custom_call.1} parent=5 // pred_fallthru
      _
    %p1925 = scmp.le.s32.totalorder 2, %s8
    // Predicated region
    $region33: #{tpu_custom_call.1} parent=5 // pred_check
      %p1926 = pneg %p1925
    $region34: #{tpu_custom_call.1} parent=5 // pred_check_branch
      %1928 = sbr.rel (%p1926) target = $region36
    $region35: #{tpu_custom_call.1} parent=5 // pred_region
      %s1929 = ssub.s32 %s8, 2
      // Predicated region
      $region37: #{tpu_custom_call.1} parent=35 // pred_check
        %p1930 = pneg %p84
      $region38: #{tpu_custom_call.1} parent=35 // pred_check_branch
        %1932 = sbr.rel (%p1930) target = $region40
      $region39: #{tpu_custom_call.1} parent=35 // pred_region
        %s1933 = smul.u32 8, %s14
        %p1934 = scmp.lt.s32.totalorder %s1933, 15
        %s1935 = scalar_select %p1934, %s1933, 15
        %s1936 = smul.addr %s1935, 8
        %s1937 = scalar_lea.vmem %s2, %s1936
      $region40: #{tpu_custom_call.1} parent=35 // pred_fallthru
        _
    $region36: #{tpu_custom_call.1} parent=5 // pred_fallthru
      _
  $region6: #{tpu_custom_call.1} parent=0 // loop_footer
    %s12 = sadd.s32 1, %s8
  $region7: #{tpu_custom_call.1} parent=0 // loop_footer_branch
    %7 = sbr.rel target = $region3
  $region8: #{tpu_custom_call.1} parent=0 // loop_exit
    _

</llo_original>
